<compile_context>
chip_gen: v6e
topology: v6e:2x2x1
jax: 0.10.0
libtpu: 0.0.40
codegen_flags: <defaults>
</compile_context>

<pallas_src>
import functools

import jax
import jax.numpy as jnp
from jax import lax
from jax.experimental import pallas as pl
from jax.experimental.pallas import tpu as pltpu

LEAKY_SLOPE = 0.01   # F.leaky_relu default
LN_EPS = 1e-5        # nn.LayerNorm default
LANE = 128
SUBLANE = 8


def _round_up(n, m):
    return ((n + m - 1) // m) * m


def _cdiv(a, b):
    return -(-a // b)


def _tpu_kind():
    try:
        return jax.devices()[0].device_kind.lower()
    except Exception:  # pragma: no cover - defensive
        return ""


def _is_v7x():
    kind = _tpu_kind()
    return ("v7" in kind) or ("7x" in kind)


def _leaky_relu(x):
    return jnp.where(x > 0, x, LEAKY_SLOPE * x)


def _layer_norm_ref(x, gamma, beta):
    mu = jnp.mean(x, axis=-1, keepdims=True)
    var = jnp.mean((x - mu) * (x - mu), axis=-1, keepdims=True)
    return (x - mu) * lax.rsqrt(var + LN_EPS) * gamma + beta


def _layer_norm_padded(h, gamma, beta, d_true):
    """LayerNorm over the first `d_true` lanes of a lane-padded activation.

    Padded lanes of `h` are zero, so plain sums over the full padded axis equal
    sums over the true features; gamma/beta padded lanes are zero, so the
    padded lanes of the output stay exactly zero (gamma*(h-mu)*rsqrt + beta).
    No iota/mask needed (pure VPU savings on the dominant slot).
    """
    inv_d = 1.0 / float(d_true)
    mu = jnp.sum(h, axis=-1, keepdims=True) * inv_d
    var = jnp.sum(h * h, axis=-1, keepdims=True) * inv_d - mu * mu
    var = jnp.maximum(var, 0.0)  # guard tiny negative from E[h^2]-mu^2 rounding
    return (h - mu) * lax.rsqrt(var + LN_EPS) * gamma + beta


def actor_kernel(x_ref,
                 w1_ref, b1_ref, g1_ref, be1_ref,
                 w2_ref, b2_ref, g2_ref, be2_ref,
                 w3_ref, b3_ref,
                 o_ref,
                 *, layer_norm: bool, d1_true: int, d2_true: int):
    def mm(a, w_ref):
        w = w_ref[...]                       # already in its compute dtype (bf16/f32)
        return jnp.dot(a.astype(w.dtype), w, preferred_element_type=jnp.float32)

    x = x_ref[...]

    # ---- layer 1: Linear (+ LayerNorm) + LeakyReLU --------------------------
    h1 = mm(x, w1_ref) + b1_ref[...]
    if layer_norm:
        h1 = _layer_norm_padded(h1, g1_ref[...], be1_ref[...], d1_true)
    h1 = _leaky_relu(h1)

    # ---- layer 2: Linear (+ LayerNorm) + LeakyReLU --------------------------
    h2 = mm(h1, w2_ref) + b2_ref[...]
    if layer_norm:
        h2 = _layer_norm_padded(h2, g2_ref[...], be2_ref[...], d2_true)
    h2 = _leaky_relu(h2)

    # ---- final layer: Linear + tanh -----------------------------------------
    out = mm(h2, w3_ref) + b3_ref[...]
    o_ref[...] = jnp.tanh(out).astype(o_ref.dtype)


def _pad2(a, rows, cols):
    return jnp.pad(a, ((0, rows - a.shape[0]), (0, cols - a.shape[1])))


def prepare_actor_params(params, *, use_bf16=True, feature_pad=LANE):
    """Pad + cast parameters ONCE (do this at init, not per forward call).

    Weights -> bf16 (if use_bf16) so no per-step weight cast and half the
    resident VMEM / HBM->VMEM DMA; biases / gamma / beta stay f32 (they are
    added to f32 accumulators).  All feature axes are zero-padded to
    `feature_pad` lanes (128; use 256 on v6e/v7x if true hidden dims > 128 to
    better fill the 256x256 MXU).
    """
    state_dim, d1 = params["w1"].shape
    d2 = params["w2"].shape[1]
    n_actions = params["w3"].shape[1]

    p_in = _round_up(state_dim, feature_pad)
    p_d1 = _round_up(d1, feature_pad)
    p_d2 = _round_up(d2, feature_pad)
    p_out = _round_up(n_actions, feature_pad)

    wdt = jnp.bfloat16 if use_bf16 else jnp.float32
    arrays = (
        _pad2(params["w1"], p_in, p_d1).astype(wdt),
        _pad2(params["b1"], 1, p_d1).astype(jnp.float32),
        _pad2(params["g1"], 1, p_d1).astype(jnp.float32),
        _pad2(params["be1"], 1, p_d1).astype(jnp.float32),
        _pad2(params["w2"], p_d1, p_d2).astype(wdt),
        _pad2(params["b2"], 1, p_d2).astype(jnp.float32),
        _pad2(params["g2"], 1, p_d2).astype(jnp.float32),
        _pad2(params["be2"], 1, p_d2).astype(jnp.float32),
        _pad2(params["w3"], p_d2, p_out).astype(wdt),
        _pad2(params["b3"], 1, p_out).astype(jnp.float32),
    )
    return {
        "arrays": tuple(jax.device_put(a) for a in arrays),
        "true_dims": (state_dim, d1, d2, n_actions),
        "padded_dims": (p_in, p_d1, p_d2, p_out),
    }


def actor_forward(x, prepared, *, layer_norm=True, block_b=1024,
                  min_grid_steps=None, out_dtype=jnp.float32,
                  single_buffer_params=True):
    """x: (B, stateDim) f32.  prepared: output of prepare_actor_params.
    Returns (B, nActions) in out_dtype."""
    arrays = prepared["arrays"]
    state_dim, d1, d2, n_actions = prepared["true_dims"]
    p_in, p_d1, p_d2, p_out = prepared["padded_dims"]

    B = x.shape[0]
    assert x.shape[1] == state_dim

    # --- batch tiling: even split, >=2 steps on v7x (2 TensorCores/chip) -----
    if min_grid_steps is None:
        min_grid_steps = 2 if _is_v7x() else 1
    b8 = _round_up(B, SUBLANE)
    n_steps = max(_cdiv(b8, block_b), min_grid_steps)
    tile_b = _round_up(_cdiv(b8, n_steps), SUBLANE)
    n_steps = _cdiv(b8, tile_b)
    b_pad = tile_b * n_steps

    x_p = jnp.pad(x.astype(jnp.float32),
                  ((0, b_pad - B), (0, p_in - state_dim)))

    # --- VMEM budget computed from actual buffer sizes ------------------------
    out_itemsize = jnp.dtype(out_dtype).itemsize
    param_bytes = sum(int(a.size) * a.dtype.itemsize for a in arrays)
    param_bufs = 1 if single_buffer_params else 2
    io_bytes = 2 * tile_b * p_in * 4 + 2 * tile_b * p_out * out_itemsize
    act_bytes = tile_b * (p_d1 + p_d2) * 4           # intermediate activations
    needed = param_bufs * param_bytes + io_bytes + act_bytes
    vmem_cap = (48 << 20) if _is_v7x() else (100 << 20)
    vmem_limit = int(min(max(2 * needed, 8 << 20), vmem_cap))

    flops = int(2 * b_pad * (p_in * p_d1 + p_d1 * p_d2 + p_d2 * p_out))
    transcendentals = int(b_pad * (2 + p_out))       # 2 rsqrt + tanh per lane
    bytes_accessed = int(x_p.size * 4 + b_pad * p_out * out_itemsize + param_bytes)

    vmem = pltpu.MemorySpace.VMEM
    kernel = functools.partial(actor_kernel, layer_norm=layer_norm,
                               d1_true=d1, d2_true=d2)

    def build_call(use_single_buffer):
        extra = {}
        if use_single_buffer:
            # Constant index_map -> never re-DMA'd; single buffer halves the
            # resident parameter VMEM footprint.
            extra = dict(pipeline_mode=pl.Buffered(1))

        def resident(shape):
            return pl.BlockSpec(shape, lambda i: (0, 0),
                                memory_space=vmem, **extra)

        in_specs = [
            pl.BlockSpec((tile_b, p_in), lambda i: (i, 0), memory_space=vmem),
            resident((p_in, p_d1)), resident((1, p_d1)),
            resident((1, p_d1)), resident((1, p_d1)),
            resident((p_d1, p_d2)), resident((1, p_d2)),
            resident((1, p_d2)), resident((1, p_d2)),
            resident((p_d2, p_out)), resident((1, p_out)),
        ]
        out_specs = pl.BlockSpec((tile_b, p_out), lambda i: (i, 0),
                                 memory_space=vmem)
        return pl.pallas_call(
            kernel,
            out_shape=jax.ShapeDtypeStruct((b_pad, p_out), out_dtype),
            grid=(n_steps,),
            in_specs=in_specs,
            out_specs=out_specs,
            compiler_params=pltpu.CompilerParams(
                dimension_semantics=("parallel",),
                vmem_limit_bytes=vmem_limit),
            cost_estimate=pl.CostEstimate(flops=flops,
                                          transcendentals=transcendentals,
                                          bytes_accessed=bytes_accessed),
        )

    try:
        out_p = build_call(single_buffer_params)(x_p, *arrays)
    except Exception:
        # Fallback: this jax build rejects Buffered(1); default double
        # buffering is functionally identical (just more VMEM).
        out_p = build_call(False)(x_p, *arrays)

    return out_p[:B, :n_actions]


# ----------------------------- init & reference -------------------------------

def _kaiming_uniform(key, fan_in, fan_out, a=0.01):
    # Matches nn.init.kaiming_uniform_(w, a=0.01, mode='fan_in',
    # nonlinearity='leaky_relu') up to RNG; stored transposed (in, out).
    gain = jnp.sqrt(2.0 / (1.0 + a * a))
    bound = gain * jnp.sqrt(3.0 / fan_in)
    return jax.random.uniform(key, (fan_in, fan_out), jnp.float32, -bound, bound)


def _linear_bias(key, fan_in, fan_out):
    bound = 1.0 / jnp.sqrt(fan_in)
    return jax.random.uniform(key, (1, fan_out), jnp.float32, -bound, bound)


def init_actor_params(key, state_dim, full1_dim, full2_dim, n_actions):
    ks = jax.random.split(key, 6)
    w3_bound = 1.0 / jnp.sqrt(full2_dim)
    return {
        "w1": _kaiming_uniform(ks[0], state_dim, full1_dim),
        "b1": _linear_bias(ks[1], state_dim, full1_dim),
        "g1": jnp.ones((1, full1_dim), jnp.float32),
        "be1": jnp.zeros((1, full1_dim), jnp.float32),
        "w2": _kaiming_uniform(ks[2], full1_dim, full2_dim),
        "b2": _linear_bias(ks[3], full1_dim, full2_dim),
        "g2": jnp.ones((1, full2_dim), jnp.float32),
        "be2": jnp.zeros((1, full2_dim), jnp.float32),
        "w3": jax.random.uniform(ks[4], (full2_dim, n_actions), jnp.float32,
                                 -w3_bound, w3_bound),
        "b3": jax.random.uniform(ks[5], (1, n_actions), jnp.float32,
                                 -w3_bound, w3_bound),
    }


def actor_reference(x, p, *, layer_norm=True, use_bf16=True):
    def mm(a, w):
        if use_bf16:
            a = a.astype(jnp.bfloat16)
            w = w.astype(jnp.bfloat16)
        return jnp.dot(a, w, preferred_element_type=jnp.float32)

    h = mm(x, p["w1"]) + p["b1"]
    if layer_norm:
        h = _layer_norm_ref(h, p["g1"], p["be1"])
    h = _leaky_relu(h)
    h = mm(h, p["w2"]) + p["b2"]
    if layer_norm:
        h = _layer_norm_ref(h, p["g2"], p["be2"])
    h = _leaky_relu(h)
    return jnp.tanh(mm(h, p["w3"]) + p["b3"])

# TODO(synk): Adam optimizer state and save/loadCheckpoint file I/O from the
# PyTorch module are out of scope for a forward-pass kernel.


if __name__ == "__main__":
    key = jax.random.PRNGKey(0)
    k_param, k_x, k_x2 = jax.random.split(key, 3)

    batch, state_dim, full1_dim, full2_dim, n_actions = 2, 16, 32, 32, 8
    params = init_actor_params(k_param, state_dim, full1_dim, full2_dim, n_actions)
    x = jax.random.normal(k_x, (batch, state_dim), jnp.float32)

    prepared_f32 = prepare_actor_params(params, use_bf16=False)
    prepared_bf16 = prepare_actor_params(params, use_bf16=True)

    # f32 matmul path (tight check of padding / mask-free LayerNorm), both branches.
    out_ln_f32 = actor_forward(x, prepared_f32, layer_norm=True)
    jax.block_until_ready(out_ln_f32)
    ref_ln_f32 = actor_reference(x, params, layer_norm=True, use_bf16=False)
    assert out_ln_f32.shape == (batch, n_actions)
    assert jnp.allclose(out_ln_f32, ref_ln_f32, atol=1e-4, rtol=1e-4)

    out_noln_f32 = actor_forward(x, prepared_f32, layer_norm=False)
    ref_noln_f32 = actor_reference(x, params, layer_norm=False, use_bf16=False)
    assert jnp.allclose(out_noln_f32, ref_noln_f32, atol=1e-4, rtol=1e-4)

    # bf16 weight path (recommended fast path on v6e/v7x).
    out_ln_bf16 = actor_forward(x, prepared_bf16, layer_norm=True)
    jax.block_until_ready(out_ln_bf16)
    ref_ln_bf16 = actor_reference(x, params, layer_norm=True, use_bf16=True)
    assert out_ln_bf16.shape == (batch, n_actions)
    assert jnp.allclose(out_ln_bf16, ref_ln_bf16, atol=5e-3, rtol=5e-3)

    # Multi-step grid path (even batch split, resident params across steps).
    x_big = jax.random.normal(k_x2, (40, state_dim), jnp.float32)
    out_big = actor_forward(x_big, prepared_f32, layer_norm=True,
                            block_b=16, min_grid_steps=2)
    jax.block_until_ready(out_big)
    ref_big = actor_reference(x_big, params, layer_norm=True, use_bf16=False)
    assert out_big.shape == (40, n_actions)
    assert jnp.allclose(out_big, ref_big, atol=1e-4, rtol=1e-4)

    print("KERNEL_OK")
</pallas_src>

<mosaic_0001>
module attributes {stable_mosaic.version = 11 : i64} {
  func.func @actor_kernel(%arg0: i32, %arg1: memref<8x128xf32, #tpu.memory_space<vmem>>, %arg2: memref<128x128xf32, #tpu.memory_space<vmem>>, %arg3: memref<1x128xf32, #tpu.memory_space<vmem>>, %arg4: memref<1x128xf32, #tpu.memory_space<vmem>>, %arg5: memref<1x128xf32, #tpu.memory_space<vmem>>, %arg6: memref<128x128xf32, #tpu.memory_space<vmem>>, %arg7: memref<1x128xf32, #tpu.memory_space<vmem>>, %arg8: memref<1x128xf32, #tpu.memory_space<vmem>>, %arg9: memref<1x128xf32, #tpu.memory_space<vmem>>, %arg10: memref<128x128xf32, #tpu.memory_space<vmem>>, %arg11: memref<1x128xf32, #tpu.memory_space<vmem>>, %arg12: memref<8x128xf32, #tpu.memory_space<vmem>>) attributes {dimension_semantics = [#tpu.dimension_semantics<parallel>], iteration_bounds = array<i64: 1>, scalar_prefetch = 0 : i64, scratch_operands = 0 : i64, tpu.core_type = #tpu.core_type<tc>, window_params = [{transform_indices = @transform_0, window_bounds = array<i64: 8, 128>}, {pipeline_mode = #tpu.pipeline_mode<synchronous>, transform_indices = @transform_1, window_bounds = array<i64: 128, 128>}, {pipeline_mode = #tpu.pipeline_mode<synchronous>, transform_indices = @transform_2, window_bounds = array<i64: 1, 128>}, {pipeline_mode = #tpu.pipeline_mode<synchronous>, transform_indices = @transform_3, window_bounds = array<i64: 1, 128>}, {pipeline_mode = #tpu.pipeline_mode<synchronous>, transform_indices = @transform_4, window_bounds = array<i64: 1, 128>}, {pipeline_mode = #tpu.pipeline_mode<synchronous>, transform_indices = @transform_5, window_bounds = array<i64: 128, 128>}, {pipeline_mode = #tpu.pipeline_mode<synchronous>, transform_indices = @transform_6, window_bounds = array<i64: 1, 128>}, {pipeline_mode = #tpu.pipeline_mode<synchronous>, transform_indices = @transform_7, window_bounds = array<i64: 1, 128>}, {pipeline_mode = #tpu.pipeline_mode<synchronous>, transform_indices = @transform_8, window_bounds = array<i64: 1, 128>}, {pipeline_mode = #tpu.pipeline_mode<synchronous>, transform_indices = @transform_9, window_bounds = array<i64: 128, 128>}, {pipeline_mode = #tpu.pipeline_mode<synchronous>, transform_indices = @transform_10, window_bounds = array<i64: 1, 128>}, {transform_indices = @transform_11, window_bounds = array<i64: 8, 128>}]} {
    %c0 = arith.constant 0 : index
    %c0_0 = arith.constant 0 : index
    %0 = vector.load %arg1[%c0, %c0_0] : memref<8x128xf32, #tpu.memory_space<vmem>>, vector<8x128xf32>
    %c0_1 = arith.constant 0 : index
    %c0_2 = arith.constant 0 : index
    %1 = vector.load %arg2[%c0_1, %c0_2] : memref<128x128xf32, #tpu.memory_space<vmem>>, vector<128x128xf32>
    %cst = arith.constant dense<0.000000e+00> : vector<8x128xf32>
    %2 = tpu.matmul %0, %1, %cst {dimension_numbers = #tpu.dot_dimension_numbers<[1], [0], [0], [1], [0, 0, 1, 1], [], []>} : vector<8x128xf32>, vector<128x128xf32>, vector<8x128xf32> -> vector<8x128xf32>
    %c0_3 = arith.constant 0 : index
    %c0_4 = arith.constant 0 : index
    %3 = vector.load %arg3[%c0_3, %c0_4] : memref<1x128xf32, #tpu.memory_space<vmem>>, vector<1x128xf32>
    %4 = vector.broadcast %3 : vector<1x128xf32> to vector<8x128xf32>
    %5 = arith.addf %2, %4 : vector<8x128xf32>
    %c0_5 = arith.constant 0 : index
    %c0_6 = arith.constant 0 : index
    %6 = vector.load %arg4[%c0_5, %c0_6] : memref<1x128xf32, #tpu.memory_space<vmem>>, vector<1x128xf32>
    %c0_7 = arith.constant 0 : index
    %c0_8 = arith.constant 0 : index
    %7 = vector.load %arg5[%c0_7, %c0_8] : memref<1x128xf32, #tpu.memory_space<vmem>>, vector<1x128xf32>
    %cst_9 = arith.constant dense<0.000000e+00> : vector<8xf32>
    %8 = vector.multi_reduction <add>, %5, %cst_9 [1] : vector<8x128xf32> to vector<8xf32>
    %9 = vector.shape_cast %8 : vector<8xf32> to vector<8x1xf32>
    %cst_10 = arith.constant 3.125000e-02 : f32
    %10 = vector.broadcast %cst_10 : f32 to vector<8x1xf32>
    %11 = arith.mulf %9, %10 : vector<8x1xf32>
    %12 = arith.mulf %5, %5 : vector<8x128xf32>
    %cst_11 = arith.constant dense<0.000000e+00> : vector<8xf32>
    %13 = vector.multi_reduction <add>, %12, %cst_11 [1] : vector<8x128xf32> to vector<8xf32>
    %14 = vector.shape_cast %13 : vector<8xf32> to vector<8x1xf32>
    %cst_12 = arith.constant 3.125000e-02 : f32
    %15 = vector.broadcast %cst_12 : f32 to vector<8x1xf32>
    %16 = arith.mulf %14, %15 : vector<8x1xf32>
    %17 = arith.mulf %11, %11 : vector<8x1xf32>
    %18 = arith.subf %16, %17 : vector<8x1xf32>
    %cst_13 = arith.constant 0.000000e+00 : f32
    %19 = vector.broadcast %cst_13 : f32 to vector<8x1xf32>
    %20 = arith.maximumf %18, %19 : vector<8x1xf32>
    %21 = vector.broadcast %11 : vector<8x1xf32> to vector<8x128xf32>
    %22 = arith.subf %5, %21 : vector<8x128xf32>
    %cst_14 = arith.constant 9.99999974E-6 : f32
    %23 = vector.broadcast %cst_14 : f32 to vector<8x1xf32>
    %24 = arith.addf %20, %23 : vector<8x1xf32>
    %25 = math.rsqrt %24 : vector<8x1xf32>
    %26 = vector.broadcast %25 : vector<8x1xf32> to vector<8x128xf32>
    %27 = arith.mulf %22, %26 : vector<8x128xf32>
    %28 = vector.broadcast %6 : vector<1x128xf32> to vector<8x128xf32>
    %29 = arith.mulf %27, %28 : vector<8x128xf32>
    %30 = vector.broadcast %7 : vector<1x128xf32> to vector<8x128xf32>
    %31 = arith.addf %29, %30 : vector<8x128xf32>
    %cst_15 = arith.constant 0.000000e+00 : f32
    %32 = vector.broadcast %cst_15 : f32 to vector<8x128xf32>
    %33 = arith.cmpf ogt, %31, %32 : vector<8x128xf32>
    %cst_16 = arith.constant 0.00999999977 : f32
    %34 = vector.broadcast %cst_16 : f32 to vector<8x128xf32>
    %35 = arith.mulf %34, %31 : vector<8x128xf32>
    %36 = arith.select %33, %31, %35 : vector<8x128xi1>, vector<8x128xf32>
    %c0_17 = arith.constant 0 : index
    %c0_18 = arith.constant 0 : index
    %37 = vector.load %arg6[%c0_17, %c0_18] : memref<128x128xf32, #tpu.memory_space<vmem>>, vector<128x128xf32>
    %cst_19 = arith.constant dense<0.000000e+00> : vector<8x128xf32>
    %38 = tpu.matmul %36, %37, %cst_19 {dimension_numbers = #tpu.dot_dimension_numbers<[1], [0], [0], [1], [0, 0, 1, 1], [], []>} : vector<8x128xf32>, vector<128x128xf32>, vector<8x128xf32> -> vector<8x128xf32>
    %c0_20 = arith.constant 0 : index
    %c0_21 = arith.constant 0 : index
    %39 = vector.load %arg7[%c0_20, %c0_21] : memref<1x128xf32, #tpu.memory_space<vmem>>, vector<1x128xf32>
    %40 = vector.broadcast %39 : vector<1x128xf32> to vector<8x128xf32>
    %41 = arith.addf %38, %40 : vector<8x128xf32>
    %c0_22 = arith.constant 0 : index
    %c0_23 = arith.constant 0 : index
    %42 = vector.load %arg8[%c0_22, %c0_23] : memref<1x128xf32, #tpu.memory_space<vmem>>, vector<1x128xf32>
    %c0_24 = arith.constant 0 : index
    %c0_25 = arith.constant 0 : index
    %43 = vector.load %arg9[%c0_24, %c0_25] : memref<1x128xf32, #tpu.memory_space<vmem>>, vector<1x128xf32>
    %cst_26 = arith.constant dense<0.000000e+00> : vector<8xf32>
    %44 = vector.multi_reduction <add>, %41, %cst_26 [1] : vector<8x128xf32> to vector<8xf32>
    %45 = vector.shape_cast %44 : vector<8xf32> to vector<8x1xf32>
    %cst_27 = arith.constant 3.125000e-02 : f32
    %46 = vector.broadcast %cst_27 : f32 to vector<8x1xf32>
    %47 = arith.mulf %45, %46 : vector<8x1xf32>
    %48 = arith.mulf %41, %41 : vector<8x128xf32>
    %cst_28 = arith.constant dense<0.000000e+00> : vector<8xf32>
    %49 = vector.multi_reduction <add>, %48, %cst_28 [1] : vector<8x128xf32> to vector<8xf32>
    %50 = vector.shape_cast %49 : vector<8xf32> to vector<8x1xf32>
    %cst_29 = arith.constant 3.125000e-02 : f32
    %51 = vector.broadcast %cst_29 : f32 to vector<8x1xf32>
    %52 = arith.mulf %50, %51 : vector<8x1xf32>
    %53 = arith.mulf %47, %47 : vector<8x1xf32>
    %54 = arith.subf %52, %53 : vector<8x1xf32>
    %cst_30 = arith.constant 0.000000e+00 : f32
    %55 = vector.broadcast %cst_30 : f32 to vector<8x1xf32>
    %56 = arith.maximumf %54, %55 : vector<8x1xf32>
    %57 = vector.broadcast %47 : vector<8x1xf32> to vector<8x128xf32>
    %58 = arith.subf %41, %57 : vector<8x128xf32>
    %cst_31 = arith.constant 9.99999974E-6 : f32
    %59 = vector.broadcast %cst_31 : f32 to vector<8x1xf32>
    %60 = arith.addf %56, %59 : vector<8x1xf32>
    %61 = math.rsqrt %60 : vector<8x1xf32>
    %62 = vector.broadcast %61 : vector<8x1xf32> to vector<8x128xf32>
    %63 = arith.mulf %58, %62 : vector<8x128xf32>
    %64 = vector.broadcast %42 : vector<1x128xf32> to vector<8x128xf32>
    %65 = arith.mulf %63, %64 : vector<8x128xf32>
    %66 = vector.broadcast %43 : vector<1x128xf32> to vector<8x128xf32>
    %67 = arith.addf %65, %66 : vector<8x128xf32>
    %cst_32 = arith.constant 0.000000e+00 : f32
    %68 = vector.broadcast %cst_32 : f32 to vector<8x128xf32>
    %69 = arith.cmpf ogt, %67, %68 : vector<8x128xf32>
    %cst_33 = arith.constant 0.00999999977 : f32
    %70 = vector.broadcast %cst_33 : f32 to vector<8x128xf32>
    %71 = arith.mulf %70, %67 : vector<8x128xf32>
    %72 = arith.select %69, %67, %71 : vector<8x128xi1>, vector<8x128xf32>
    %c0_34 = arith.constant 0 : index
    %c0_35 = arith.constant 0 : index
    %73 = vector.load %arg10[%c0_34, %c0_35] : memref<128x128xf32, #tpu.memory_space<vmem>>, vector<128x128xf32>
    %cst_36 = arith.constant dense<0.000000e+00> : vector<8x128xf32>
    %74 = tpu.matmul %72, %73, %cst_36 {dimension_numbers = #tpu.dot_dimension_numbers<[1], [0], [0], [1], [0, 0, 1, 1], [], []>} : vector<8x128xf32>, vector<128x128xf32>, vector<8x128xf32> -> vector<8x128xf32>
    %c0_37 = arith.constant 0 : index
    %c0_38 = arith.constant 0 : index
    %75 = vector.load %arg11[%c0_37, %c0_38] : memref<1x128xf32, #tpu.memory_space<vmem>>, vector<1x128xf32>
    %76 = vector.broadcast %75 : vector<1x128xf32> to vector<8x128xf32>
    %77 = arith.addf %74, %76 : vector<8x128xf32>
    %78 = math.tanh %77 : vector<8x128xf32>
    %c0_39 = arith.constant 0 : index
    %c0_40 = arith.constant 0 : index
    %79 = vector.load %arg12[%c0_39, %c0_40] : memref<8x128xf32, #tpu.memory_space<vmem>>, vector<8x128xf32>
    tpu.vector_store %arg12[%c0_39, %c0_40], %78 {strides = array<i32>} : memref<8x128xf32, #tpu.memory_space<vmem>>, vector<8x128xf32>,
    return
  }
  func.func @transform_0(%arg0: i32) -> (i32, i32) {
    %c0_i32 = arith.constant 0 : i32
    %c0_i32_0 = arith.constant 0 : i32
    return %arg0, %c0_i32 : i32, i32
  }
  func.func @transform_1(%arg0: i32) -> (i32, i32) {
    %c0_i32 = arith.constant 0 : i32
    %c0_i32_0 = arith.constant 0 : i32
    %c0_i32_1 = arith.constant 0 : i32
    return %c0_i32, %c0_i32_0 : i32, i32
  }
  func.func @transform_2(%arg0: i32) -> (i32, i32) {
    %c0_i32 = arith.constant 0 : i32
    %c0_i32_0 = arith.constant 0 : i32
    %c0_i32_1 = arith.constant 0 : i32
    return %c0_i32, %c0_i32_0 : i32, i32
  }
  func.func @transform_3(%arg0: i32) -> (i32, i32) {
    %c0_i32 = arith.constant 0 : i32
    %c0_i32_0 = arith.constant 0 : i32
    %c0_i32_1 = arith.constant 0 : i32
    return %c0_i32, %c0_i32_0 : i32, i32
  }
  func.func @transform_4(%arg0: i32) -> (i32, i32) {
    %c0_i32 = arith.constant 0 : i32
    %c0_i32_0 = arith.constant 0 : i32
    %c0_i32_1 = arith.constant 0 : i32
    return %c0_i32, %c0_i32_0 : i32, i32
  }
  func.func @transform_5(%arg0: i32) -> (i32, i32) {
    %c0_i32 = arith.constant 0 : i32
    %c0_i32_0 = arith.constant 0 : i32
    %c0_i32_1 = arith.constant 0 : i32
    return %c0_i32, %c0_i32_0 : i32, i32
  }
  func.func @transform_6(%arg0: i32) -> (i32, i32) {
    %c0_i32 = arith.constant 0 : i32
    %c0_i32_0 = arith.constant 0 : i32
    %c0_i32_1 = arith.constant 0 : i32
    return %c0_i32, %c0_i32_0 : i32, i32
  }
  func.func @transform_7(%arg0: i32) -> (i32, i32) {
    %c0_i32 = arith.constant 0 : i32
    %c0_i32_0 = arith.constant 0 : i32
    %c0_i32_1 = arith.constant 0 : i32
    return %c0_i32, %c0_i32_0 : i32, i32
  }
  func.func @transform_8(%arg0: i32) -> (i32, i32) {
    %c0_i32 = arith.constant 0 : i32
    %c0_i32_0 = arith.constant 0 : i32
    %c0_i32_1 = arith.constant 0 : i32
    return %c0_i32, %c0_i32_0 : i32, i32
  }
  func.func @transform_9(%arg0: i32) -> (i32, i32) {
    %c0_i32 = arith.constant 0 : i32
    %c0_i32_0 = arith.constant 0 : i32
    %c0_i32_1 = arith.constant 0 : i32
    return %c0_i32, %c0_i32_0 : i32, i32
  }
  func.func @transform_10(%arg0: i32) -> (i32, i32) {
    %c0_i32 = arith.constant 0 : i32
    %c0_i32_0 = arith.constant 0 : i32
    %c0_i32_1 = arith.constant 0 : i32
    return %c0_i32, %c0_i32_0 : i32, i32
  }
  func.func @transform_11(%arg0: i32) -> (i32, i32) {
    %c0_i32 = arith.constant 0 : i32
    %c0_i32_0 = arith.constant 0 : i32
    return %arg0, %c0_i32 : i32, i32
  }
}

module attributes {stable_mosaic.version = 11 : i64} {
  func.func @actor_kernel(%arg0: i32, %arg1: memref<8x128xf32, #tpu.memory_space<vmem>>, %arg2: memref<128x128xf32, #tpu.memory_space<vmem>>, %arg3: memref<1x128xf32, #tpu.memory_space<vmem>>, %arg4: memref<1x128xf32, #tpu.memory_space<vmem>>, %arg5: memref<1x128xf32, #tpu.memory_space<vmem>>, %arg6: memref<128x128xf32, #tpu.memory_space<vmem>>, %arg7: memref<1x128xf32, #tpu.memory_space<vmem>>, %arg8: memref<1x128xf32, #tpu.memory_space<vmem>>, %arg9: memref<1x128xf32, #tpu.memory_space<vmem>>, %arg10: memref<128x128xf32, #tpu.memory_space<vmem>>, %arg11: memref<1x128xf32, #tpu.memory_space<vmem>>, %arg12: memref<8x128xf32, #tpu.memory_space<vmem>>) attributes {dimension_semantics = [#tpu.dimension_semantics<parallel>], iteration_bounds = array<i64: 1>, scalar_prefetch = 0 : i64, scratch_operands = 0 : i64, tpu.core_type = #tpu.core_type<tc>, window_params = [{transform_indices = @transform_0, window_bounds = array<i64: 8, 128>}, {pipeline_mode = #tpu.pipeline_mode<synchronous>, transform_indices = @transform_1, window_bounds = array<i64: 128, 128>}, {pipeline_mode = #tpu.pipeline_mode<synchronous>, transform_indices = @transform_2, window_bounds = array<i64: 1, 128>}, {pipeline_mode = #tpu.pipeline_mode<synchronous>, transform_indices = @transform_3, window_bounds = array<i64: 1, 128>}, {pipeline_mode = #tpu.pipeline_mode<synchronous>, transform_indices = @transform_4, window_bounds = array<i64: 1, 128>}, {pipeline_mode = #tpu.pipeline_mode<synchronous>, transform_indices = @transform_5, window_bounds = array<i64: 128, 128>}, {pipeline_mode = #tpu.pipeline_mode<synchronous>, transform_indices = @transform_6, window_bounds = array<i64: 1, 128>}, {pipeline_mode = #tpu.pipeline_mode<synchronous>, transform_indices = @transform_7, window_bounds = array<i64: 1, 128>}, {pipeline_mode = #tpu.pipeline_mode<synchronous>, transform_indices = @transform_8, window_bounds = array<i64: 1, 128>}, {pipeline_mode = #tpu.pipeline_mode<synchronous>, transform_indices = @transform_9, window_bounds = array<i64: 128, 128>}, {pipeline_mode = #tpu.pipeline_mode<synchronous>, transform_indices = @transform_10, window_bounds = array<i64: 1, 128>}, {transform_indices = @transform_11, window_bounds = array<i64: 8, 128>}]} {
    %c0 = arith.constant 0 : index
    %c0_0 = arith.constant 0 : index
    %0 = vector.load %arg1[%c0, %c0_0] : memref<8x128xf32, #tpu.memory_space<vmem>>, vector<8x128xf32>
    %c0_1 = arith.constant 0 : index
    %c0_2 = arith.constant 0 : index
    %1 = vector.load %arg2[%c0_1, %c0_2] : memref<128x128xf32, #tpu.memory_space<vmem>>, vector<128x128xf32>
    %cst = arith.constant dense<0.000000e+00> : vector<8x128xf32>
    %2 = tpu.matmul %0, %1, %cst {dimension_numbers = #tpu.dot_dimension_numbers<[1], [0], [0], [1], [0, 0, 1, 1], [], []>} : vector<8x128xf32>, vector<128x128xf32>, vector<8x128xf32> -> vector<8x128xf32>
    %c0_3 = arith.constant 0 : index
    %c0_4 = arith.constant 0 : index
    %3 = vector.load %arg3[%c0_3, %c0_4] : memref<1x128xf32, #tpu.memory_space<vmem>>, vector<1x128xf32>
    %4 = vector.broadcast %3 : vector<1x128xf32> to vector<8x128xf32>
    %5 = arith.addf %2, %4 : vector<8x128xf32>
    %c0_5 = arith.constant 0 : index
    %c0_6 = arith.constant 0 : index
    %6 = vector.load %arg4[%c0_5, %c0_6] : memref<1x128xf32, #tpu.memory_space<vmem>>, vector<1x128xf32>
    %c0_7 = arith.constant 0 : index
    %c0_8 = arith.constant 0 : index
    %7 = vector.load %arg5[%c0_7, %c0_8] : memref<1x128xf32, #tpu.memory_space<vmem>>, vector<1x128xf32>
    %cst_9 = arith.constant dense<0.000000e+00> : vector<8xf32>
    %8 = vector.multi_reduction <add>, %5, %cst_9 [1] : vector<8x128xf32> to vector<8xf32>
    %9 = vector.shape_cast %8 : vector<8xf32> to vector<8x1xf32>
    %cst_10 = arith.constant 3.125000e-02 : f32
    %10 = vector.broadcast %cst_10 : f32 to vector<8x1xf32>
    %11 = arith.mulf %9, %10 : vector<8x1xf32>
    %12 = arith.mulf %5, %5 : vector<8x128xf32>
    %cst_11 = arith.constant dense<0.000000e+00> : vector<8xf32>
    %13 = vector.multi_reduction <add>, %12, %cst_11 [1] : vector<8x128xf32> to vector<8xf32>
    %14 = vector.shape_cast %13 : vector<8xf32> to vector<8x1xf32>
    %cst_12 = arith.constant 3.125000e-02 : f32
    %15 = vector.broadcast %cst_12 : f32 to vector<8x1xf32>
    %16 = arith.mulf %14, %15 : vector<8x1xf32>
    %17 = arith.mulf %11, %11 : vector<8x1xf32>
    %18 = arith.subf %16, %17 : vector<8x1xf32>
    %cst_13 = arith.constant 0.000000e+00 : f32
    %19 = vector.broadcast %cst_13 : f32 to vector<8x1xf32>
    %20 = arith.maximumf %18, %19 : vector<8x1xf32>
    %21 = vector.broadcast %11 : vector<8x1xf32> to vector<8x128xf32>
    %22 = arith.subf %5, %21 : vector<8x128xf32>
    %cst_14 = arith.constant 9.99999974E-6 : f32
    %23 = vector.broadcast %cst_14 : f32 to vector<8x1xf32>
    %24 = arith.addf %20, %23 : vector<8x1xf32>
    %25 = math.rsqrt %24 : vector<8x1xf32>
    %26 = vector.broadcast %25 : vector<8x1xf32> to vector<8x128xf32>
    %27 = arith.mulf %22, %26 : vector<8x128xf32>
    %28 = vector.broadcast %6 : vector<1x128xf32> to vector<8x128xf32>
    %29 = arith.mulf %27, %28 : vector<8x128xf32>
    %30 = vector.broadcast %7 : vector<1x128xf32> to vector<8x128xf32>
    %31 = arith.addf %29, %30 : vector<8x128xf32>
    %cst_15 = arith.constant 0.000000e+00 : f32
    %32 = vector.broadcast %cst_15 : f32 to vector<8x128xf32>
    %33 = arith.cmpf ogt, %31, %32 : vector<8x128xf32>
    %cst_16 = arith.constant 0.00999999977 : f32
    %34 = vector.broadcast %cst_16 : f32 to vector<8x128xf32>
    %35 = arith.mulf %34, %31 : vector<8x128xf32>
    %36 = arith.select %33, %31, %35 : vector<8x128xi1>, vector<8x128xf32>
    %c0_17 = arith.constant 0 : index
    %c0_18 = arith.constant 0 : index
    %37 = vector.load %arg6[%c0_17, %c0_18] : memref<128x128xf32, #tpu.memory_space<vmem>>, vector<128x128xf32>
    %cst_19 = arith.constant dense<0.000000e+00> : vector<8x128xf32>
    %38 = tpu.matmul %36, %37, %cst_19 {dimension_numbers = #tpu.dot_dimension_numbers<[1], [0], [0], [1], [0, 0, 1, 1], [], []>} : vector<8x128xf32>, vector<128x128xf32>, vector<8x128xf32> -> vector<8x128xf32>
    %c0_20 = arith.constant 0 : index
    %c0_21 = arith.constant 0 : index
    %39 = vector.load %arg7[%c0_20, %c0_21] : memref<1x128xf32, #tpu.memory_space<vmem>>, vector<1x128xf32>
    %40 = vector.broadcast %39 : vector<1x128xf32> to vector<8x128xf32>
    %41 = arith.addf %38, %40 : vector<8x128xf32>
    %c0_22 = arith.constant 0 : index
    %c0_23 = arith.constant 0 : index
    %42 = vector.load %arg8[%c0_22, %c0_23] : memref<1x128xf32, #tpu.memory_space<vmem>>, vector<1x128xf32>
    %c0_24 = arith.constant 0 : index
    %c0_25 = arith.constant 0 : index
    %43 = vector.load %arg9[%c0_24, %c0_25] : memref<1x128xf32, #tpu.memory_space<vmem>>, vector<1x128xf32>
    %cst_26 = arith.constant dense<0.000000e+00> : vector<8xf32>
    %44 = vector.multi_reduction <add>, %41, %cst_26 [1] : vector<8x128xf32> to vector<8xf32>
    %45 = vector.shape_cast %44 : vector<8xf32> to vector<8x1xf32>
    %cst_27 = arith.constant 3.125000e-02 : f32
    %46 = vector.broadcast %cst_27 : f32 to vector<8x1xf32>
    %47 = arith.mulf %45, %46 : vector<8x1xf32>
    %48 = arith.mulf %41, %41 : vector<8x128xf32>
    %cst_28 = arith.constant dense<0.000000e+00> : vector<8xf32>
    %49 = vector.multi_reduction <add>, %48, %cst_28 [1] : vector<8x128xf32> to vector<8xf32>
    %50 = vector.shape_cast %49 : vector<8xf32> to vector<8x1xf32>
    %cst_29 = arith.constant 3.125000e-02 : f32
    %51 = vector.broadcast %cst_29 : f32 to vector<8x1xf32>
    %52 = arith.mulf %50, %51 : vector<8x1xf32>
    %53 = arith.mulf %47, %47 : vector<8x1xf32>
    %54 = arith.subf %52, %53 : vector<8x1xf32>
    %cst_30 = arith.constant 0.000000e+00 : f32
    %55 = vector.broadcast %cst_30 : f32 to vector<8x1xf32>
    %56 = arith.maximumf %54, %55 : vector<8x1xf32>
    %57 = vector.broadcast %47 : vector<8x1xf32> to vector<8x128xf32>
    %58 = arith.subf %41, %57 : vector<8x128xf32>
    %cst_31 = arith.constant 9.99999974E-6 : f32
    %59 = vector.broadcast %cst_31 : f32 to vector<8x1xf32>
    %60 = arith.addf %56, %59 : vector<8x1xf32>
    %61 = math.rsqrt %60 : vector<8x1xf32>
    %62 = vector.broadcast %61 : vector<8x1xf32> to vector<8x128xf32>
    %63 = arith.mulf %58, %62 : vector<8x128xf32>
    %64 = vector.broadcast %42 : vector<1x128xf32> to vector<8x128xf32>
    %65 = arith.mulf %63, %64 : vector<8x128xf32>
    %66 = vector.broadcast %43 : vector<1x128xf32> to vector<8x128xf32>
    %67 = arith.addf %65, %66 : vector<8x128xf32>
    %cst_32 = arith.constant 0.000000e+00 : f32
    %68 = vector.broadcast %cst_32 : f32 to vector<8x128xf32>
    %69 = arith.cmpf ogt, %67, %68 : vector<8x128xf32>
    %cst_33 = arith.constant 0.00999999977 : f32
    %70 = vector.broadcast %cst_33 : f32 to vector<8x128xf32>
    %71 = arith.mulf %70, %67 : vector<8x128xf32>
    %72 = arith.select %69, %67, %71 : vector<8x128xi1>, vector<8x128xf32>
    %c0_34 = arith.constant 0 : index
    %c0_35 = arith.constant 0 : index
    %73 = vector.load %arg10[%c0_34, %c0_35] : memref<128x128xf32, #tpu.memory_space<vmem>>, vector<128x128xf32>
    %cst_36 = arith.constant dense<0.000000e+00> : vector<8x128xf32>
    %74 = tpu.matmul %72, %73, %cst_36 {dimension_numbers = #tpu.dot_dimension_numbers<[1], [0], [0], [1], [0, 0, 1, 1], [], []>} : vector<8x128xf32>, vector<128x128xf32>, vector<8x128xf32> -> vector<8x128xf32>
    %c0_37 = arith.constant 0 : index
    %c0_38 = arith.constant 0 : index
    %75 = vector.load %arg11[%c0_37, %c0_38] : memref<1x128xf32, #tpu.memory_space<vmem>>, vector<1x128xf32>
    %76 = vector.broadcast %75 : vector<1x128xf32> to vector<8x128xf32>
    %77 = arith.addf %74, %76 : vector<8x128xf32>
    %78 = math.tanh %77 : vector<8x128xf32>
    %c0_39 = arith.constant 0 : index
    %c0_40 = arith.constant 0 : index
    %79 = vector.load %arg12[%c0_39, %c0_40] : memref<8x128xf32, #tpu.memory_space<vmem>>, vector<8x128xf32>
    tpu.vector_store %arg12[%c0_39, %c0_40], %78 {strides = array<i32>} : memref<8x128xf32, #tpu.memory_space<vmem>>, vector<8x128xf32>,
    return
  }
  func.func @transform_0(%arg0: i32) -> (i32, i32) {
    %c0_i32 = arith.constant 0 : i32
    %c0_i32_0 = arith.constant 0 : i32
    return %arg0, %c0_i32 : i32, i32
  }
  func.func @transform_1(%arg0: i32) -> (i32, i32) {
    %c0_i32 = arith.constant 0 : i32
    %c0_i32_0 = arith.constant 0 : i32
    %c0_i32_1 = arith.constant 0 : i32
    return %c0_i32, %c0_i32_0 : i32, i32
  }
  func.func @transform_2(%arg0: i32) -> (i32, i32) {
    %c0_i32 = arith.constant 0 : i32
    %c0_i32_0 = arith.constant 0 : i32
    %c0_i32_1 = arith.constant 0 : i32
    return %c0_i32, %c0_i32_0 : i32, i32
  }
  func.func @transform_3(%arg0: i32) -> (i32, i32) {
    %c0_i32 = arith.constant 0 : i32
    %c0_i32_0 = arith.constant 0 : i32
    %c0_i32_1 = arith.constant 0 : i32
    return %c0_i32, %c0_i32_0 : i32, i32
  }
  func.func @transform_4(%arg0: i32) -> (i32, i32) {
    %c0_i32 = arith.constant 0 : i32
    %c0_i32_0 = arith.constant 0 : i32
    %c0_i32_1 = arith.constant 0 : i32
    return %c0_i32, %c0_i32_0 : i32, i32
  }
  func.func @transform_5(%arg0: i32) -> (i32, i32) {
    %c0_i32 = arith.constant 0 : i32
    %c0_i32_0 = arith.constant 0 : i32
    %c0_i32_1 = arith.constant 0 : i32
    return %c0_i32, %c0_i32_0 : i32, i32
  }
  func.func @transform_6(%arg0: i32) -> (i32, i32) {
    %c0_i32 = arith.constant 0 : i32
    %c0_i32_0 = arith.constant 0 : i32
    %c0_i32_1 = arith.constant 0 : i32
    return %c0_i32, %c0_i32_0 : i32, i32
  }
  func.func @transform_7(%arg0: i32) -> (i32, i32) {
    %c0_i32 = arith.constant 0 : i32
    %c0_i32_0 = arith.constant 0 : i32
    %c0_i32_1 = arith.constant 0 : i32
    return %c0_i32, %c0_i32_0 : i32, i32
  }
  func.func @transform_8(%arg0: i32) -> (i32, i32) {
    %c0_i32 = arith.constant 0 : i32
    %c0_i32_0 = arith.constant 0 : i32
    %c0_i32_1 = arith.constant 0 : i32
    return %c0_i32, %c0_i32_0 : i32, i32
  }
  func.func @transform_9(%arg0: i32) -> (i32, i32) {
    %c0_i32 = arith.constant 0 : i32
    %c0_i32_0 = arith.constant 0 : i32
    %c0_i32_1 = arith.constant 0 : i32
    return %c0_i32, %c0_i32_0 : i32, i32
  }
  func.func @transform_10(%arg0: i32) -> (i32, i32) {
    %c0_i32 = arith.constant 0 : i32
    %c0_i32_0 = arith.constant 0 : i32
    %c0_i32_1 = arith.constant 0 : i32
    return %c0_i32, %c0_i32_0 : i32, i32
  }
  func.func @transform_11(%arg0: i32) -> (i32, i32) {
    %c0_i32 = arith.constant 0 : i32
    %c0_i32_0 = arith.constant 0 : i32
    return %arg0, %c0_i32 : i32, i32
  }
}

</mosaic_0001>

<llo_original>
// kernel: tpu_custom_call.1
$region0: #{tpu_custom_call.1}
  #allocation0 [shape = 'u32[]', space=smem, size = 0x4, offset = 0x4, fixed_abs, tag = 'smem constant byte address 0x4 - core index']
  #allocation1 [shape = 'u32[144,128]{1,0:T(1,128)}', space=vmem, size = 0x12000, scoped, tag = 'internal scratch']
  %s0 = inlined_call_operand.hbm [shape: f32[8,128], index: 0, kind: input, shape index: {}]
  %s1 = inlined_call_operand.hbm [shape: f32[128,128], index: 1, kind: input, shape index: {}]
  %s2 = inlined_call_operand.vmem [shape: f32[1,128], index: 2, kind: input, shape index: {}]
  %s3 = inlined_call_operand.vmem [shape: f32[1,128], index: 3, kind: input, shape index: {}]
  %s4 = inlined_call_operand.vmem [shape: f32[1,128], index: 4, kind: input, shape index: {}]
  %s5 = inlined_call_operand.hbm [shape: f32[128,128], index: 5, kind: input, shape index: {}]
  %s6 = inlined_call_operand.vmem [shape: f32[1,128], index: 6, kind: input, shape index: {}]
  %s7 = inlined_call_operand.vmem [shape: f32[1,128], index: 7, kind: input, shape index: {}]
  %s8 = inlined_call_operand.vmem [shape: f32[1,128], index: 8, kind: input, shape index: {}]
  %s9 = inlined_call_operand.hbm [shape: f32[128,128], index: 9, kind: input, shape index: {}]
  %s10 = inlined_call_operand.vmem [shape: f32[1,128], index: 10, kind: input, shape index: {}]
  %s11 = inlined_call_operand.hbm [shape: f32[8,128], index: 11, kind: output, shape index: {}]
  %s12 = sld [smem:[#allocation0]]
  $region70: #{tpu_custom_call.1} parent=0
    _
  %s14 = ssub.s32 1, %s12
  %s15 = scalar_select 0, %s14, %s12
  $region1: #{tpu_custom_call.1} parent=0
    #allocation2 [shape = 'u8[4096]{0}', space=vmem, size = 0x1000, scoped, tag = 'input window, operand 0, single buffered']
    #allocation3 [shape = 's32[1]{0}', space=sflag, size = 0x4, scoped, tag = 'scoped memory for tpu_custom_call.1']
    #allocation4 [shape = 's32[1]{0}', space=sflag, size = 0x4, scoped, tag = 'scoped memory for tpu_custom_call.1']
    #allocation5 [shape = 'u8[65536]{0}', space=vmem, size = 0x10000, scoped, tag = 'input window, operand 1, single buffered']
    #allocation6 [shape = 's32[1]{0}', space=sflag, size = 0x4, scoped, tag = 'scoped memory for tpu_custom_call.1']
    #allocation7 [shape = 'u8[65536]{0}', space=vmem, size = 0x10000, scoped, tag = 'input window, operand 5, single buffered']
    #allocation8 [shape = 'u8[65536]{0}', space=vmem, size = 0x10000, scoped, tag = 'input window, operand 9, single buffered']
    #allocation9 [shape = 's32[1]{0}', space=sflag, size = 0x4, scoped, tag = 'scoped memory for tpu_custom_call.1']
    #allocation10 [shape = 'u8[4096]{0}', space=vmem, size = 0x1000, scoped, tag = 'output window, operand 0, single buffered']
    %16 = vsyncpa [#allocation3], 0
    %17 = vsyncpa [#allocation6], 0
    %18 = vsyncpa [#allocation9], 0
    %19 = vsyncpa [#allocation4], 0
    // Predicated region
    $region2: #{tpu_custom_call.1} parent=1 // pred_check
      _
    $region3: #{tpu_custom_call.1} parent=1 // pred_check_branch
      %21 = sbr.rel (0) target = $region5
    $region4: #{tpu_custom_call.1} parent=1 // pred_region
      %s23 = ssub.s32 128, 128
      %24 = vsyncadd [#allocation3], %s23
      %s26 = sshll.u32 [#allocation2], 4
      %s27 = int_to_ptr.vmem [resolvable:$true] %s26
      %29 = dma.hbm_to_vmem [thread:$0]  %s0, 128, %s27, [#allocation3]
    $region5: #{tpu_custom_call.1} parent=1 // pred_fallthru
      _
    // Predicated region
    $region6: #{tpu_custom_call.1} parent=1 // pred_check
      _
    $region7: #{tpu_custom_call.1} parent=1 // pred_check_branch
      %31 = sbr.rel (0) target = $region9
    $region8: #{tpu_custom_call.1} parent=1 // pred_region
      %s33 = ssub.s32 2048, 2048
      %34 = vsyncadd [#allocation6], %s33
      %s35 = sshll.u32 [#allocation5], 4
      %s36 = int_to_ptr.vmem [resolvable:$true] %s35
      %41 = dma.hbm_to_vmem [thread:$0]  %s1, 2048, %s36, [#allocation6], 128, 128, 8
    $region9: #{tpu_custom_call.1} parent=1 // pred_fallthru
      _
    // Predicated region
    $region10: #{tpu_custom_call.1} parent=1 // pred_check
      _
    $region11: #{tpu_custom_call.1} parent=1 // pred_check_branch
      %43 = sbr.rel (0) target = $region13
    $region12: #{tpu_custom_call.1} parent=1 // pred_region
      _
    $region13: #{tpu_custom_call.1} parent=1 // pred_fallthru
      _
    // Predicated region
    $region14: #{tpu_custom_call.1} parent=1 // pred_check
      _
    $region15: #{tpu_custom_call.1} parent=1 // pred_check_branch
      %45 = sbr.rel (0) target = $region17
    $region16: #{tpu_custom_call.1} parent=1 // pred_region
      _
    $region17: #{tpu_custom_call.1} parent=1 // pred_fallthru
      _
    // Predicated region
    $region18: #{tpu_custom_call.1} parent=1 // pred_check
      _
    $region19: #{tpu_custom_call.1} parent=1 // pred_check_branch
      %47 = sbr.rel (0) target = $region21
    $region20: #{tpu_custom_call.1} parent=1 // pred_region
      _
    $region21: #{tpu_custom_call.1} parent=1 // pred_fallthru
      _
    // Predicated region
    $region22: #{tpu_custom_call.1} parent=1 // pred_check
      _
    $region23: #{tpu_custom_call.1} parent=1 // pred_check_branch
      %49 = sbr.rel (0) target = $region25
    $region24: #{tpu_custom_call.1} parent=1 // pred_region
      %s51 = ssub.s32 2048, 2048
      %52 = vsyncadd [#allocation6], %s51
      %s53 = sshll.u32 [#allocation7], 4
      %s54 = int_to_ptr.vmem [resolvable:$true] %s53
      %59 = dma.hbm_to_vmem [thread:$0]  %s5, 2048, %s54, [#allocation6], 128, 128, 8
    $region25: #{tpu_custom_call.1} parent=1 // pred_fallthru
      _
    // Predicated region
    $region26: #{tpu_custom_call.1} parent=1 // pred_check
      _
    $region27: #{tpu_custom_call.1} parent=1 // pred_check_branch
      %61 = sbr.rel (0) target = $region29
    $region28: #{tpu_custom_call.1} parent=1 // pred_region
      _
    $region29: #{tpu_custom_call.1} parent=1 // pred_fallthru
      _
    // Predicated region
    $region30: #{tpu_custom_call.1} parent=1 // pred_check
      _
    $region31: #{tpu_custom_call.1} parent=1 // pred_check_branch
      %63 = sbr.rel (0) target = $region33
    $region32: #{tpu_custom_call.1} parent=1 // pred_region
      _
    $region33: #{tpu_custom_call.1} parent=1 // pred_fallthru
      _
    // Predicated region
    $region34: #{tpu_custom_call.1} parent=1 // pred_check
      _
    $region35: #{tpu_custom_call.1} parent=1 // pred_check_branch
      %65 = sbr.rel (0) target = $region37
    $region36: #{tpu_custom_call.1} parent=1 // pred_region
      _
    $region37: #{tpu_custom_call.1} parent=1 // pred_fallthru
      _
    // Predicated region
    $region38: #{tpu_custom_call.1} parent=1 // pred_check
      _
    $region39: #{tpu_custom_call.1} parent=1 // pred_check_branch
      %67 = sbr.rel (0) target = $region41
    $region40: #{tpu_custom_call.1} parent=1 // pred_region
      %s69 = ssub.s32 2048, 2048
      %70 = vsyncadd [#allocation9], %s69
      %s71 = sshll.u32 [#allocation8], 4
      %s72 = int_to_ptr.vmem [resolvable:$true] %s71
      %77 = dma.hbm_to_vmem [thread:$0]  %s9, 2048, %s72, [#allocation9], 128, 128, 8
    $region41: #{tpu_custom_call.1} parent=1 // pred_fallthru
      _
    // Predicated region
    $region42: #{tpu_custom_call.1} parent=1 // pred_check
      _
    $region43: #{tpu_custom_call.1} parent=1 // pred_check_branch
      %79 = sbr.rel (0) target = $region45
    $region44: #{tpu_custom_call.1} parent=1 // pred_region
      _
    $region45: #{tpu_custom_call.1} parent=1 // pred_fallthru
      _
    // Predicated region
    $region46: #{tpu_custom_call.1} parent=1 // pred_check
      _
    $region47: #{tpu_custom_call.1} parent=1 // pred_check_branch
      %81 = sbr.rel (0) target = $region49
    $region48: #{tpu_custom_call.1} parent=1 // pred_region
      %82 = dma.done [#allocation3], 128
    $region49: #{tpu_custom_call.1} parent=1 // pred_fallthru
      _
    // Predicated region
    $region50: #{tpu_custom_call.1} parent=1 // pred_check
      _
    $region51: #{tpu_custom_call.1} parent=1 // pred_check_branch
      %84 = sbr.rel (0) target = $region53
    $region52: #{tpu_custom_call.1} parent=1 // pred_region
      %85 = dma.done [#allocation6], 2048
    $region53: #{tpu_custom_call.1} parent=1 // pred_fallthru
      _
    // Predicated region
    $region54: #{tpu_custom_call.1} parent=1 // pred_check
      _
    $region55: #{tpu_custom_call.1} parent=1 // pred_check_branch
      %87 = sbr.rel (0) target = $region57
    $region56: #{tpu_custom_call.1} parent=1 // pred_region
      %88 = dma.done [#allocation6], 2048
    $region57: #{tpu_custom_call.1} parent=1 // pred_fallthru
      _
    // Predicated region
    $region58: #{tpu_custom_call.1} parent=1 // pred_check
      _
    $region59: #{tpu_custom_call.1} parent=1 // pred_check_branch
      %90 = sbr.rel (0) target = $region61
    $region60: #{tpu_custom_call.1} parent=1 // pred_region
      %91 = dma.done [#allocation9], 2048
    $region61: #{tpu_custom_call.1} parent=1 // pred_fallthru
      _
    %v92 = vld [vmem:[#allocation2] sm:$0xff]
    %v93 = vld [vmem:[#allocation5] sm:$0xff]
    %v94 = vld [vmem:[#allocation5 + $0x8] sm:$0xff]
    %v95 = vld [vmem:[#allocation5 + $0x10] sm:$0xff]
    %v96 = vld [vmem:[#allocation5 + $0x18] sm:$0xff]
    %v97 = vld [vmem:[#allocation5 + $0x20] sm:$0xff]
    %v98 = vld [vmem:[#allocation5 + $0x28] sm:$0xff]
    %v99 = vld [vmem:[#allocation5 + $0x30] sm:$0xff]
    %v100 = vld [vmem:[#allocation5 + $0x38] sm:$0xff]
    %v101 = vld [vmem:[#allocation5 + $0x40] sm:$0xff]
    %v102 = vld [vmem:[#allocation5 + $0x48] sm:$0xff]
    %v103 = vld [vmem:[#allocation5 + $0x50] sm:$0xff]
    %v104 = vld [vmem:[#allocation5 + $0x58] sm:$0xff]
    %v105 = vld [vmem:[#allocation5 + $0x60] sm:$0xff]
    %v106 = vld [vmem:[#allocation5 + $0x68] sm:$0xff]
    %v107 = vld [vmem:[#allocation5 + $0x70] sm:$0xff]
    %v108 = vld [vmem:[#allocation5 + $0x78] sm:$0xff]
    %v109 = vld [vmem:[%s2] sm:$0x1]
    %v111 = vlaneseq
    %v112 = vshrl.u32 %v111, 7
    %v113 = vsub.s32 0, %v112
    %v114 = vrot.slane %v109, %v113
    %116 = vmatprep.subr.mxu0 0.0
    %117 = vmatpush1.msra.mxu0 %v108
    %118 = vmatprep.subr.mxu0 0.0
    %119 = vmatpush1.msra.mxu0 %v107
    %120 = vmatprep.subr.mxu0 0.0
    %121 = vmatpush1.msra.mxu0 %v106
    %122 = vmatprep.subr.mxu0 0.0
    %123 = vmatpush1.msra.mxu0 %v105
    %124 = vmatprep.subr.mxu0 0.0
    %125 = vmatpush1.msra.mxu0 %v104
    %126 = vmatprep.subr.mxu0 0.0
    %127 = vmatpush1.msra.mxu0 %v103
    %128 = vmatprep.subr.mxu0 0.0
    %129 = vmatpush1.msra.mxu0 %v102
    %130 = vmatprep.subr.mxu0 0.0
    %131 = vmatpush1.msra.mxu0 %v101
    %132 = vmatprep.subr.mxu0 0.0
    %133 = vmatpush1.msra.mxu0 %v100
    %134 = vmatprep.subr.mxu0 0.0
    %135 = vmatpush1.msra.mxu0 %v99
    %136 = vmatprep.subr.mxu0 0.0
    %137 = vmatpush1.msra.mxu0 %v98
    %138 = vmatprep.subr.mxu0 0.0
    %139 = vmatpush1.msra.mxu0 %v97
    %140 = vmatprep.subr.mxu0 0.0
    %141 = vmatpush1.msra.mxu0 %v96
    %142 = vmatprep.subr.mxu0 0.0
    %143 = vmatpush1.msra.mxu0 %v95
    %144 = vmatprep.subr.mxu0 0.0
    %145 = vmatpush1.msra.mxu0 %v94
    %146 = vmatprep.subr.mxu0 0.0
    %147 = vmatpush1.msra.mxu0 %v93
    %148 = vmatprep.subr.mxu0 0.0
    %149 = vmatpush2.msra.mxu0 0.0
    %150 = vmatprep.subr.mxu0 0.0
    %151 = vmatpush2.msra.mxu0 0.0
    %152 = vmatprep.subr.mxu0 0.0
    %153 = vmatpush2.msra.mxu0 0.0
    %154 = vmatprep.subr.mxu0 0.0
    %155 = vmatpush2.msra.mxu0 0.0
    %156 = vmatprep.subr.mxu0 0.0
    %157 = vmatpush2.msra.mxu0 0.0
    %158 = vmatprep.subr.mxu0 0.0
    %159 = vmatpush2.msra.mxu0 0.0
    %160 = vmatprep.subr.mxu0 0.0
    %161 = vmatpush2.msra.mxu0 0.0
    %162 = vmatprep.subr.mxu0 0.0
    %163 = vmatpush2.msra.mxu0 0.0
    %164 = vmatprep.subr.mxu0 0.0
    %165 = vmatpush2.msra.mxu0 0.0
    %166 = vmatprep.subr.mxu0 0.0
    %167 = vmatpush2.msra.mxu0 0.0
    %168 = vmatprep.subr.mxu0 0.0
    %169 = vmatpush2.msra.mxu0 0.0
    %170 = vmatprep.subr.mxu0 0.0
    %171 = vmatpush2.msra.mxu0 0.0
    %172 = vmatprep.subr.mxu0 0.0
    %173 = vmatpush2.msra.mxu0 0.0
    %174 = vmatprep.subr.mxu0 0.0
    %175 = vmatpush2.msra.mxu0 0.0
    %176 = vmatprep.subr.mxu0 0.0
    %177 = vmatpush2.msra.mxu0 0.0
    %178 = vmatprep.subr.mxu0 0.0
    %179 = vmatpush2.msra.mxu0 0.0
    %180 = vmatprep.mubr.f32.mxu0 0.0
    %181 = vmatmul.mubr.f32.gmra.mxu0 %v92
    %v182 = vpop.f32.mrf.mxu0
    %v183 = vadd.f32 %v114, %v182
    %v184 = vpop.f32.mrf.mxu0
    %185 = vdwg.mxu0
    %v186 = vld [vmem:[%s3] sm:$0x1]
    %v187 = vld [vmem:[%s4] sm:$0x1]
    %188 = vadd.xlane.f32.xlu0 %v183
    %v189 = vpop.xlane.xlu0 %188
    %v190 = vmul.f32 %v189, 0.03125
    %v191 = vmul.f32 %v183, %v183
    %192 = vadd.xlane.f32.xlu0 %v191
    %v193 = vpop.xlane.xlu0 %192
    %v194 = vmul.f32 %v193, 0.03125
    %v195 = vmul.f32 %v190, %v190
    %v196 = vsub.f32 %v194, %v195
    %v197 = vmax.f32 %v196, 0.0
    %v198 = vsub.f32 %v183, %v190
    %v199 = vadd.f32 %v197, 1e-05
    %v200 = vrsqrt.pop %v199
    %v201 = vmul.f32 %v198, %v200
    %v203 = vlaneseq
    %v204 = vshrl.u32 %v203, 7
    %v205 = vsub.s32 0, %v204
    %v206 = vrot.slane %v186, %v205
    %v208 = vmul.f32 %v201, %v206
    %v210 = vlaneseq
    %v211 = vshrl.u32 %v210, 7
    %v212 = vsub.s32 0, %v211
    %v213 = vrot.slane %v187, %v212
    %v215 = vadd.f32 %v208, %v213
    %vm216 = vcmp.gt.f32.partialorder %v215, 0.0
    %v217 = vmul.f32 %v215, 0.01
    %v218 = vsel %vm216, %v215, %v217
    %v219 = vld [vmem:[#allocation7] sm:$0xff]
    %v220 = vld [vmem:[#allocation7 + $0x8] sm:$0xff]
    %v221 = vld [vmem:[#allocation7 + $0x10] sm:$0xff]
    %v222 = vld [vmem:[#allocation7 + $0x18] sm:$0xff]
    %v223 = vld [vmem:[#allocation7 + $0x20] sm:$0xff]
    %v224 = vld [vmem:[#allocation7 + $0x28] sm:$0xff]
    %v225 = vld [vmem:[#allocation7 + $0x30] sm:$0xff]
    %v226 = vld [vmem:[#allocation7 + $0x38] sm:$0xff]
    %v227 = vld [vmem:[#allocation7 + $0x40] sm:$0xff]
    %v228 = vld [vmem:[#allocation7 + $0x48] sm:$0xff]
    %v229 = vld [vmem:[#allocation7 + $0x50] sm:$0xff]
    %v230 = vld [vmem:[#allocation7 + $0x58] sm:$0xff]
    %v231 = vld [vmem:[#allocation7 + $0x60] sm:$0xff]
    %v232 = vld [vmem:[#allocation7 + $0x68] sm:$0xff]
    %v233 = vld [vmem:[#allocation7 + $0x70] sm:$0xff]
    %v234 = vld [vmem:[#allocation7 + $0x78] sm:$0xff]
    %v235 = vld [vmem:[%s6] sm:$0x1]
    %v237 = vlaneseq
    %v238 = vshrl.u32 %v237, 7
    %v239 = vsub.s32 0, %v238
    %v240 = vrot.slane %v235, %v239
    %242 = vmatprep.subr.mxu0 0.0
    %243 = vmatpush1.msra.mxu0 %v234
    %244 = vmatprep.subr.mxu0 0.0
    %245 = vmatpush1.msra.mxu0 %v233
    %246 = vmatprep.subr.mxu0 0.0
    %247 = vmatpush1.msra.mxu0 %v232
    %248 = vmatprep.subr.mxu0 0.0
    %249 = vmatpush1.msra.mxu0 %v231
    %250 = vmatprep.subr.mxu0 0.0
    %251 = vmatpush1.msra.mxu0 %v230
    %252 = vmatprep.subr.mxu0 0.0
    %253 = vmatpush1.msra.mxu0 %v229
    %254 = vmatprep.subr.mxu0 0.0
    %255 = vmatpush1.msra.mxu0 %v228
    %256 = vmatprep.subr.mxu0 0.0
    %257 = vmatpush1.msra.mxu0 %v227
    %258 = vmatprep.subr.mxu0 0.0
    %259 = vmatpush1.msra.mxu0 %v226
    %260 = vmatprep.subr.mxu0 0.0
    %261 = vmatpush1.msra.mxu0 %v225
    %262 = vmatprep.subr.mxu0 0.0
    %263 = vmatpush1.msra.mxu0 %v224
    %264 = vmatprep.subr.mxu0 0.0
    %265 = vmatpush1.msra.mxu0 %v223
    %266 = vmatprep.subr.mxu0 0.0
    %267 = vmatpush1.msra.mxu0 %v222
    %268 = vmatprep.subr.mxu0 0.0
    %269 = vmatpush1.msra.mxu0 %v221
    %270 = vmatprep.subr.mxu0 0.0
    %271 = vmatpush1.msra.mxu0 %v220
    %272 = vmatprep.subr.mxu0 0.0
    %273 = vmatpush1.msra.mxu0 %v219
    %274 = vmatprep.subr.mxu0 0.0
    %275 = vmatpush2.msra.mxu0 0.0
    %276 = vmatprep.subr.mxu0 0.0
    %277 = vmatpush2.msra.mxu0 0.0
    %278 = vmatprep.subr.mxu0 0.0
    %279 = vmatpush2.msra.mxu0 0.0
    %280 = vmatprep.subr.mxu0 0.0
    %281 = vmatpush2.msra.mxu0 0.0
    %282 = vmatprep.subr.mxu0 0.0
    %283 = vmatpush2.msra.mxu0 0.0
    %284 = vmatprep.subr.mxu0 0.0
    %285 = vmatpush2.msra.mxu0 0.0
    %286 = vmatprep.subr.mxu0 0.0
    %287 = vmatpush2.msra.mxu0 0.0
    %288 = vmatprep.subr.mxu0 0.0
    %289 = vmatpush2.msra.mxu0 0.0
    %290 = vmatprep.subr.mxu0 0.0
    %291 = vmatpush2.msra.mxu0 0.0
    %292 = vmatprep.subr.mxu0 0.0
    %293 = vmatpush2.msra.mxu0 0.0
    %294 = vmatprep.subr.mxu0 0.0
    %295 = vmatpush2.msra.mxu0 0.0
    %296 = vmatprep.subr.mxu0 0.0
    %297 = vmatpush2.msra.mxu0 0.0
    %298 = vmatprep.subr.mxu0 0.0
    %299 = vmatpush2.msra.mxu0 0.0
    %300 = vmatprep.subr.mxu0 0.0
    %301 = vmatpush2.msra.mxu0 0.0
    %302 = vmatprep.subr.mxu0 0.0
    %303 = vmatpush2.msra.mxu0 0.0
    %304 = vmatprep.subr.mxu0 0.0
    %305 = vmatpush2.msra.mxu0 0.0
    %306 = vmatprep.mubr.f32.mxu0 0.0
    %307 = vmatmul.mubr.f32.gmra.mxu0 %v218
    %v308 = vpop.f32.mrf.mxu0
    %v309 = vadd.f32 %v240, %v308
    %v310 = vpop.f32.mrf.mxu0
    %311 = vdwg.mxu0
    %v312 = vld [vmem:[%s7] sm:$0x1]
    %v313 = vld [vmem:[%s8] sm:$0x1]
    %314 = vadd.xlane.f32.xlu0 %v309
    %v315 = vpop.xlane.xlu0 %314
    %v316 = vmul.f32 %v315, 0.03125
    %v317 = vmul.f32 %v309, %v309
    %318 = vadd.xlane.f32.xlu0 %v317
    %v319 = vpop.xlane.xlu0 %318
    %v320 = vmul.f32 %v319, 0.03125
    %v321 = vmul.f32 %v316, %v316
    %v322 = vsub.f32 %v320, %v321
    %v323 = vmax.f32 %v322, 0.0
    %v324 = vsub.f32 %v309, %v316
    %v325 = vadd.f32 %v323, 1e-05
    %v326 = vrsqrt.pop %v325
    %v327 = vmul.f32 %v324, %v326
    %v329 = vlaneseq
    %v330 = vshrl.u32 %v329, 7
    %v331 = vsub.s32 0, %v330
    %v332 = vrot.slane %v312, %v331
    %v334 = vmul.f32 %v327, %v332
    %v336 = vlaneseq
    %v337 = vshrl.u32 %v336, 7
    %v338 = vsub.s32 0, %v337
    %v339 = vrot.slane %v313, %v338
    %v341 = vadd.f32 %v334, %v339
    %vm342 = vcmp.gt.f32.partialorder %v341, 0.0
    %v343 = vmul.f32 %v341, 0.01
    %v344 = vsel %vm342, %v341, %v343
    %v345 = vld [vmem:[#allocation8] sm:$0xff]
    %v346 = vld [vmem:[#allocation8 + $0x8] sm:$0xff]
    %v347 = vld [vmem:[#allocation8 + $0x10] sm:$0xff]
    %v348 = vld [vmem:[#allocation8 + $0x18] sm:$0xff]
    %v349 = vld [vmem:[#allocation8 + $0x20] sm:$0xff]
    %v350 = vld [vmem:[#allocation8 + $0x28] sm:$0xff]
    %v351 = vld [vmem:[#allocation8 + $0x30] sm:$0xff]
    %v352 = vld [vmem:[#allocation8 + $0x38] sm:$0xff]
    %v353 = vld [vmem:[#allocation8 + $0x40] sm:$0xff]
    %v354 = vld [vmem:[#allocation8 + $0x48] sm:$0xff]
    %v355 = vld [vmem:[#allocation8 + $0x50] sm:$0xff]
    %v356 = vld [vmem:[#allocation8 + $0x58] sm:$0xff]
    %v357 = vld [vmem:[#allocation8 + $0x60] sm:$0xff]
    %v358 = vld [vmem:[#allocation8 + $0x68] sm:$0xff]
    %v359 = vld [vmem:[#allocation8 + $0x70] sm:$0xff]
    %v360 = vld [vmem:[#allocation8 + $0x78] sm:$0xff]
    %v361 = vld [vmem:[%s10] sm:$0x1]
    %v363 = vlaneseq
    %v364 = vshrl.u32 %v363, 7
    %v365 = vsub.s32 0, %v364
    %v366 = vrot.slane %v361, %v365
    %368 = vmatprep.subr.mxu0 0.0
    %369 = vmatpush1.msra.mxu0 %v360
    %370 = vmatprep.subr.mxu0 0.0
    %371 = vmatpush1.msra.mxu0 %v359
    %372 = vmatprep.subr.mxu0 0.0
    %373 = vmatpush1.msra.mxu0 %v358
    %374 = vmatprep.subr.mxu0 0.0
    %375 = vmatpush1.msra.mxu0 %v357
    %376 = vmatprep.subr.mxu0 0.0
    %377 = vmatpush1.msra.mxu0 %v356
    %378 = vmatprep.subr.mxu0 0.0
    %379 = vmatpush1.msra.mxu0 %v355
    %380 = vmatprep.subr.mxu0 0.0
    %381 = vmatpush1.msra.mxu0 %v354
    %382 = vmatprep.subr.mxu0 0.0
    %383 = vmatpush1.msra.mxu0 %v353
    %384 = vmatprep.subr.mxu0 0.0
    %385 = vmatpush1.msra.mxu0 %v352
    %386 = vmatprep.subr.mxu0 0.0
    %387 = vmatpush1.msra.mxu0 %v351
    %388 = vmatprep.subr.mxu0 0.0
    %389 = vmatpush1.msra.mxu0 %v350
    %390 = vmatprep.subr.mxu0 0.0
    %391 = vmatpush1.msra.mxu0 %v349
    %392 = vmatprep.subr.mxu0 0.0
    %393 = vmatpush1.msra.mxu0 %v348
    %394 = vmatprep.subr.mxu0 0.0
    %395 = vmatpush1.msra.mxu0 %v347
    %396 = vmatprep.subr.mxu0 0.0
    %397 = vmatpush1.msra.mxu0 %v346
    %398 = vmatprep.subr.mxu0 0.0
    %399 = vmatpush1.msra.mxu0 %v345
    %400 = vmatprep.subr.mxu0 0.0
    %401 = vmatpush2.msra.mxu0 0.0
    %402 = vmatprep.subr.mxu0 0.0
    %403 = vmatpush2.msra.mxu0 0.0
    %404 = vmatprep.subr.mxu0 0.0
    %405 = vmatpush2.msra.mxu0 0.0
    %406 = vmatprep.subr.mxu0 0.0
    %407 = vmatpush2.msra.mxu0 0.0
    %408 = vmatprep.subr.mxu0 0.0
    %409 = vmatpush2.msra.mxu0 0.0
    %410 = vmatprep.subr.mxu0 0.0
    %411 = vmatpush2.msra.mxu0 0.0
    %412 = vmatprep.subr.mxu0 0.0
    %413 = vmatpush2.msra.mxu0 0.0
    %414 = vmatprep.subr.mxu0 0.0
    %415 = vmatpush2.msra.mxu0 0.0
    %416 = vmatprep.subr.mxu0 0.0
    %417 = vmatpush2.msra.mxu0 0.0
    %418 = vmatprep.subr.mxu0 0.0
    %419 = vmatpush2.msra.mxu0 0.0
    %420 = vmatprep.subr.mxu0 0.0
    %421 = vmatpush2.msra.mxu0 0.0
    %422 = vmatprep.subr.mxu0 0.0
    %423 = vmatpush2.msra.mxu0 0.0
    %424 = vmatprep.subr.mxu0 0.0
    %425 = vmatpush2.msra.mxu0 0.0
    %426 = vmatprep.subr.mxu0 0.0
    %427 = vmatpush2.msra.mxu0 0.0
    %428 = vmatprep.subr.mxu0 0.0
    %429 = vmatpush2.msra.mxu0 0.0
    %430 = vmatprep.subr.mxu0 0.0
    %431 = vmatpush2.msra.mxu0 0.0
    %432 = vmatprep.mubr.f32.mxu0 0.0
    %433 = vmatmul.mubr.f32.gmra.mxu0 %v344
    %v434 = vpop.f32.mrf.mxu0
    %v435 = vadd.f32 %v366, %v434
    %v436 = vpop.f32.mrf.mxu0
    %437 = vdwg.mxu0
    %v438 = vtanh.pop %v435
    %439 = vst [vmem:[#allocation10] sm:$0xff] %v438
    // Predicated region
    $region62: #{tpu_custom_call.1} parent=1 // pred_check
      _
    $region63: #{tpu_custom_call.1} parent=1 // pred_check_branch
      %441 = sbr.rel (0) target = $region65
    $region64: #{tpu_custom_call.1} parent=1 // pred_region
      %s443 = ssub.s32 128, 128
      %444 = vsyncadd [#allocation4], %s443
      %s446 = sshll.u32 [#allocation10], 4
      %s447 = int_to_ptr.vmem [resolvable:$true] %s446
      %449 = dma.vmem_to_hbm [thread:$0]  %s447, 128, %s11, [#allocation4]
    $region65: #{tpu_custom_call.1} parent=1 // pred_fallthru
      _
    // Predicated region
    $region66: #{tpu_custom_call.1} parent=1 // pred_check
      _
    $region67: #{tpu_custom_call.1} parent=1 // pred_check_branch
      %451 = sbr.rel (0) target = $region69
    $region68: #{tpu_custom_call.1} parent=1 // pred_region
      %452 = dma.done [#allocation4], 128
    $region69: #{tpu_custom_call.1} parent=1 // pred_fallthru
      _
    %453 = vsyncpa [#allocation3], 1
    %454 = vsyncpa [#allocation6], 1
    %455 = vsyncpa [#allocation9], 1
    %456 = vsyncpa [#allocation4], 1

// kernel: tpu_custom_call.1
$region0: #{tpu_custom_call.1}
  #allocation0 [shape = 'u32[]', space=smem, size = 0x4, offset = 0x4, fixed_abs, tag = 'smem constant byte address 0x4 - core index']
  #allocation1 [shape = 'u32[144,128]{1,0:T(1,128)}', space=vmem, size = 0x12000, scoped, tag = 'internal scratch']
  %s0 = inlined_call_operand.hbm [shape: f32[8,128], index: 0, kind: input, shape index: {}]
  %s1 = inlined_call_operand.hbm [shape: f32[128,128], index: 1, kind: input, shape index: {}]
  %s2 = inlined_call_operand.vmem [shape: f32[1,128], index: 2, kind: input, shape index: {}]
  %s3 = inlined_call_operand.vmem [shape: f32[1,128], index: 3, kind: input, shape index: {}]
  %s4 = inlined_call_operand.vmem [shape: f32[1,128], index: 4, kind: input, shape index: {}]
  %s5 = inlined_call_operand.hbm [shape: f32[128,128], index: 5, kind: input, shape index: {}]
  %s6 = inlined_call_operand.vmem [shape: f32[1,128], index: 6, kind: input, shape index: {}]
  %s7 = inlined_call_operand.vmem [shape: f32[1,128], index: 7, kind: input, shape index: {}]
  %s8 = inlined_call_operand.vmem [shape: f32[1,128], index: 8, kind: input, shape index: {}]
  %s9 = inlined_call_operand.hbm [shape: f32[128,128], index: 9, kind: input, shape index: {}]
  %s10 = inlined_call_operand.vmem [shape: f32[1,128], index: 10, kind: input, shape index: {}]
  %s11 = inlined_call_operand.hbm [shape: f32[8,128], index: 11, kind: output, shape index: {}]
  %s12 = sld [smem:[#allocation0]]
  $region70: #{tpu_custom_call.1} parent=0
    _
  %s14 = ssub.s32 1, %s12
  %s15 = scalar_select 0, %s14, %s12
  $region1: #{tpu_custom_call.1} parent=0
    #allocation2 [shape = 'u8[4096]{0}', space=vmem, size = 0x1000, scoped, tag = 'input window, operand 0, single buffered']
    #allocation3 [shape = 's32[1]{0}', space=sflag, size = 0x4, scoped, tag = 'scoped memory for tpu_custom_call.1']
    #allocation4 [shape = 's32[1]{0}', space=sflag, size = 0x4, scoped, tag = 'scoped memory for tpu_custom_call.1']
    #allocation5 [shape = 'u8[65536]{0}', space=vmem, size = 0x10000, scoped, tag = 'input window, operand 1, single buffered']
    #allocation6 [shape = 's32[1]{0}', space=sflag, size = 0x4, scoped, tag = 'scoped memory for tpu_custom_call.1']
    #allocation7 [shape = 'u8[65536]{0}', space=vmem, size = 0x10000, scoped, tag = 'input window, operand 5, single buffered']
    #allocation8 [shape = 'u8[65536]{0}', space=vmem, size = 0x10000, scoped, tag = 'input window, operand 9, single buffered']
    #allocation9 [shape = 's32[1]{0}', space=sflag, size = 0x4, scoped, tag = 'scoped memory for tpu_custom_call.1']
    #allocation10 [shape = 'u8[4096]{0}', space=vmem, size = 0x1000, scoped, tag = 'output window, operand 0, single buffered']
    %16 = vsyncpa [#allocation3], 0
    %17 = vsyncpa [#allocation6], 0
    %18 = vsyncpa [#allocation9], 0
    %19 = vsyncpa [#allocation4], 0
    // Predicated region
    $region2: #{tpu_custom_call.1} parent=1 // pred_check
      _
    $region3: #{tpu_custom_call.1} parent=1 // pred_check_branch
      %21 = sbr.rel (0) target = $region5
    $region4: #{tpu_custom_call.1} parent=1 // pred_region
      %s23 = ssub.s32 128, 128
      %24 = vsyncadd [#allocation3], %s23
      %s26 = sshll.u32 [#allocation2], 4
      %s27 = int_to_ptr.vmem [resolvable:$true] %s26
      %29 = dma.hbm_to_vmem [thread:$0]  %s0, 128, %s27, [#allocation3]
    $region5: #{tpu_custom_call.1} parent=1 // pred_fallthru
      _
    // Predicated region
    $region6: #{tpu_custom_call.1} parent=1 // pred_check
      _
    $region7: #{tpu_custom_call.1} parent=1 // pred_check_branch
      %31 = sbr.rel (0) target = $region9
    $region8: #{tpu_custom_call.1} parent=1 // pred_region
      %s33 = ssub.s32 2048, 2048
      %34 = vsyncadd [#allocation6], %s33
      %s35 = sshll.u32 [#allocation5], 4
      %s36 = int_to_ptr.vmem [resolvable:$true] %s35
      %41 = dma.hbm_to_vmem [thread:$0]  %s1, 2048, %s36, [#allocation6], 128, 128, 8
    $region9: #{tpu_custom_call.1} parent=1 // pred_fallthru
      _
    // Predicated region
    $region10: #{tpu_custom_call.1} parent=1 // pred_check
      _
    $region11: #{tpu_custom_call.1} parent=1 // pred_check_branch
      %43 = sbr.rel (0) target = $region13
    $region12: #{tpu_custom_call.1} parent=1 // pred_region
      _
    $region13: #{tpu_custom_call.1} parent=1 // pred_fallthru
      _
    // Predicated region
    $region14: #{tpu_custom_call.1} parent=1 // pred_check
      _
    $region15: #{tpu_custom_call.1} parent=1 // pred_check_branch
      %45 = sbr.rel (0) target = $region17
    $region16: #{tpu_custom_call.1} parent=1 // pred_region
      _
    $region17: #{tpu_custom_call.1} parent=1 // pred_fallthru
      _
    // Predicated region
    $region18: #{tpu_custom_call.1} parent=1 // pred_check
      _
    $region19: #{tpu_custom_call.1} parent=1 // pred_check_branch
      %47 = sbr.rel (0) target = $region21
    $region20: #{tpu_custom_call.1} parent=1 // pred_region
      _
    $region21: #{tpu_custom_call.1} parent=1 // pred_fallthru
      _
    // Predicated region
    $region22: #{tpu_custom_call.1} parent=1 // pred_check
      _
    $region23: #{tpu_custom_call.1} parent=1 // pred_check_branch
      %49 = sbr.rel (0) target = $region25
    $region24: #{tpu_custom_call.1} parent=1 // pred_region
      %s51 = ssub.s32 2048, 2048
      %52 = vsyncadd [#allocation6], %s51
      %s53 = sshll.u32 [#allocation7], 4
      %s54 = int_to_ptr.vmem [resolvable:$true] %s53
      %59 = dma.hbm_to_vmem [thread:$0]  %s5, 2048, %s54, [#allocation6], 128, 128, 8
    $region25: #{tpu_custom_call.1} parent=1 // pred_fallthru
      _
    // Predicated region
    $region26: #{tpu_custom_call.1} parent=1 // pred_check
      _
    $region27: #{tpu_custom_call.1} parent=1 // pred_check_branch
      %61 = sbr.rel (0) target = $region29
    $region28: #{tpu_custom_call.1} parent=1 // pred_region
      _
    $region29: #{tpu_custom_call.1} parent=1 // pred_fallthru
      _
    // Predicated region
    $region30: #{tpu_custom_call.1} parent=1 // pred_check
      _
    $region31: #{tpu_custom_call.1} parent=1 // pred_check_branch
      %63 = sbr.rel (0) target = $region33
    $region32: #{tpu_custom_call.1} parent=1 // pred_region
      _
    $region33: #{tpu_custom_call.1} parent=1 // pred_fallthru
      _
    // Predicated region
    $region34: #{tpu_custom_call.1} parent=1 // pred_check
      _
    $region35: #{tpu_custom_call.1} parent=1 // pred_check_branch
      %65 = sbr.rel (0) target = $region37
    $region36: #{tpu_custom_call.1} parent=1 // pred_region
      _
    $region37: #{tpu_custom_call.1} parent=1 // pred_fallthru
      _
    // Predicated region
    $region38: #{tpu_custom_call.1} parent=1 // pred_check
      _
    $region39: #{tpu_custom_call.1} parent=1 // pred_check_branch
      %67 = sbr.rel (0) target = $region41
    $region40: #{tpu_custom_call.1} parent=1 // pred_region
      %s69 = ssub.s32 2048, 2048
      %70 = vsyncadd [#allocation9], %s69
      %s71 = sshll.u32 [#allocation8], 4
      %s72 = int_to_ptr.vmem [resolvable:$true] %s71
      %77 = dma.hbm_to_vmem [thread:$0]  %s9, 2048, %s72, [#allocation9], 128, 128, 8
    $region41: #{tpu_custom_call.1} parent=1 // pred_fallthru
      _
    // Predicated region
    $region42: #{tpu_custom_call.1} parent=1 // pred_check
      _
    $region43: #{tpu_custom_call.1} parent=1 // pred_check_branch
      %79 = sbr.rel (0) target = $region45
    $region44: #{tpu_custom_call.1} parent=1 // pred_region
      _
    $region45: #{tpu_custom_call.1} parent=1 // pred_fallthru
      _
    // Predicated region
    $region46: #{tpu_custom_call.1} parent=1 // pred_check
      _
    $region47: #{tpu_custom_call.1} parent=1 // pred_check_branch
      %81 = sbr.rel (0) target = $region49
    $region48: #{tpu_custom_call.1} parent=1 // pred_region
      %82 = dma.done [#allocation3], 128
    $region49: #{tpu_custom_call.1} parent=1 // pred_fallthru
      _
    // Predicated region
    $region50: #{tpu_custom_call.1} parent=1 // pred_check
      _
    $region51: #{tpu_custom_call.1} parent=1 // pred_check_branch
      %84 = sbr.rel (0) target = $region53
    $region52: #{tpu_custom_call.1} parent=1 // pred_region
      %85 = dma.done [#allocation6], 2048
    $region53: #{tpu_custom_call.1} parent=1 // pred_fallthru
      _
    // Predicated region
    $region54: #{tpu_custom_call.1} parent=1 // pred_check
      _
    $region55: #{tpu_custom_call.1} parent=1 // pred_check_branch
      %87 = sbr.rel (0) target = $region57
    $region56: #{tpu_custom_call.1} parent=1 // pred_region
      %88 = dma.done [#allocation6], 2048
    $region57: #{tpu_custom_call.1} parent=1 // pred_fallthru
      _
    // Predicated region
    $region58: #{tpu_custom_call.1} parent=1 // pred_check
      _
    $region59: #{tpu_custom_call.1} parent=1 // pred_check_branch
      %90 = sbr.rel (0) target = $region61
    $region60: #{tpu_custom_call.1} parent=1 // pred_region
      %91 = dma.done [#allocation9], 2048
    $region61: #{tpu_custom_call.1} parent=1 // pred_fallthru
      _
    %v92 = vld [vmem:[#allocation2] sm:$0xff]
    %v93 = vld [vmem:[#allocation5] sm:$0xff]
    %v94 = vld [vmem:[#allocation5 + $0x8] sm:$0xff]
    %v95 = vld [vmem:[#allocation5 + $0x10] sm:$0xff]
    %v96 = vld [vmem:[#allocation5 + $0x18] sm:$0xff]
    %v97 = vld [vmem:[#allocation5 + $0x20] sm:$0xff]
    %v98 = vld [vmem:[#allocation5 + $0x28] sm:$0xff]
    %v99 = vld [vmem:[#allocation5 + $0x30] sm:$0xff]
    %v100 = vld [vmem:[#allocation5 + $0x38] sm:$0xff]
    %v101 = vld [vmem:[#allocation5 + $0x40] sm:$0xff]
    %v102 = vld [vmem:[#allocation5 + $0x48] sm:$0xff]
    %v103 = vld [vmem:[#allocation5 + $0x50] sm:$0xff]
    %v104 = vld [vmem:[#allocation5 + $0x58] sm:$0xff]
    %v105 = vld [vmem:[#allocation5 + $0x60] sm:$0xff]
    %v106 = vld [vmem:[#allocation5 + $0x68] sm:$0xff]
    %v107 = vld [vmem:[#allocation5 + $0x70] sm:$0xff]
    %v108 = vld [vmem:[#allocation5 + $0x78] sm:$0xff]
    %v109 = vld [vmem:[%s2] sm:$0x1]
    %v111 = vlaneseq
    %v112 = vshrl.u32 %v111, 7
    %v113 = vsub.s32 0, %v112
    %v114 = vrot.slane %v109, %v113
    %116 = vmatprep.subr.mxu0 0.0
    %117 = vmatpush1.msra.mxu0 %v108
    %118 = vmatprep.subr.mxu0 0.0
    %119 = vmatpush1.msra.mxu0 %v107
    %120 = vmatprep.subr.mxu0 0.0
    %121 = vmatpush1.msra.mxu0 %v106
    %122 = vmatprep.subr.mxu0 0.0
    %123 = vmatpush1.msra.mxu0 %v105
    %124 = vmatprep.subr.mxu0 0.0
    %125 = vmatpush1.msra.mxu0 %v104
    %126 = vmatprep.subr.mxu0 0.0
    %127 = vmatpush1.msra.mxu0 %v103
    %128 = vmatprep.subr.mxu0 0.0
    %129 = vmatpush1.msra.mxu0 %v102
    %130 = vmatprep.subr.mxu0 0.0
    %131 = vmatpush1.msra.mxu0 %v101
    %132 = vmatprep.subr.mxu0 0.0
    %133 = vmatpush1.msra.mxu0 %v100
    %134 = vmatprep.subr.mxu0 0.0
    %135 = vmatpush1.msra.mxu0 %v99
    %136 = vmatprep.subr.mxu0 0.0
    %137 = vmatpush1.msra.mxu0 %v98
    %138 = vmatprep.subr.mxu0 0.0
    %139 = vmatpush1.msra.mxu0 %v97
    %140 = vmatprep.subr.mxu0 0.0
    %141 = vmatpush1.msra.mxu0 %v96
    %142 = vmatprep.subr.mxu0 0.0
    %143 = vmatpush1.msra.mxu0 %v95
    %144 = vmatprep.subr.mxu0 0.0
    %145 = vmatpush1.msra.mxu0 %v94
    %146 = vmatprep.subr.mxu0 0.0
    %147 = vmatpush1.msra.mxu0 %v93
    %148 = vmatprep.subr.mxu0 0.0
    %149 = vmatpush2.msra.mxu0 0.0
    %150 = vmatprep.subr.mxu0 0.0
    %151 = vmatpush2.msra.mxu0 0.0
    %152 = vmatprep.subr.mxu0 0.0
    %153 = vmatpush2.msra.mxu0 0.0
    %154 = vmatprep.subr.mxu0 0.0
    %155 = vmatpush2.msra.mxu0 0.0
    %156 = vmatprep.subr.mxu0 0.0
    %157 = vmatpush2.msra.mxu0 0.0
    %158 = vmatprep.subr.mxu0 0.0
    %159 = vmatpush2.msra.mxu0 0.0
    %160 = vmatprep.subr.mxu0 0.0
    %161 = vmatpush2.msra.mxu0 0.0
    %162 = vmatprep.subr.mxu0 0.0
    %163 = vmatpush2.msra.mxu0 0.0
    %164 = vmatprep.subr.mxu0 0.0
    %165 = vmatpush2.msra.mxu0 0.0
    %166 = vmatprep.subr.mxu0 0.0
    %167 = vmatpush2.msra.mxu0 0.0
    %168 = vmatprep.subr.mxu0 0.0
    %169 = vmatpush2.msra.mxu0 0.0
    %170 = vmatprep.subr.mxu0 0.0
    %171 = vmatpush2.msra.mxu0 0.0
    %172 = vmatprep.subr.mxu0 0.0
    %173 = vmatpush2.msra.mxu0 0.0
    %174 = vmatprep.subr.mxu0 0.0
    %175 = vmatpush2.msra.mxu0 0.0
    %176 = vmatprep.subr.mxu0 0.0
    %177 = vmatpush2.msra.mxu0 0.0
    %178 = vmatprep.subr.mxu0 0.0
    %179 = vmatpush2.msra.mxu0 0.0
    %180 = vmatprep.mubr.f32.mxu0 0.0
    %181 = vmatmul.mubr.f32.gmra.mxu0 %v92
    %v182 = vpop.f32.mrf.mxu0
    %v183 = vadd.f32 %v114, %v182
    %v184 = vpop.f32.mrf.mxu0
    %185 = vdwg.mxu0
    %v186 = vld [vmem:[%s3] sm:$0x1]
    %v187 = vld [vmem:[%s4] sm:$0x1]
    %188 = vadd.xlane.f32.xlu0 %v183
    %v189 = vpop.xlane.xlu0 %188
    %v190 = vmul.f32 %v189, 0.03125
    %v191 = vmul.f32 %v183, %v183
    %192 = vadd.xlane.f32.xlu0 %v191
    %v193 = vpop.xlane.xlu0 %192
    %v194 = vmul.f32 %v193, 0.03125
    %v195 = vmul.f32 %v190, %v190
    %v196 = vsub.f32 %v194, %v195
    %v197 = vmax.f32 %v196, 0.0
    %v198 = vsub.f32 %v183, %v190
    %v199 = vadd.f32 %v197, 1e-05
    %v200 = vrsqrt.pop %v199
    %v201 = vmul.f32 %v198, %v200
    %v203 = vlaneseq
    %v204 = vshrl.u32 %v203, 7
    %v205 = vsub.s32 0, %v204
    %v206 = vrot.slane %v186, %v205
    %v208 = vmul.f32 %v201, %v206
    %v210 = vlaneseq
    %v211 = vshrl.u32 %v210, 7
    %v212 = vsub.s32 0, %v211
    %v213 = vrot.slane %v187, %v212
    %v215 = vadd.f32 %v208, %v213
    %vm216 = vcmp.gt.f32.partialorder %v215, 0.0
    %v217 = vmul.f32 %v215, 0.01
    %v218 = vsel %vm216, %v215, %v217
    %v219 = vld [vmem:[#allocation7] sm:$0xff]
    %v220 = vld [vmem:[#allocation7 + $0x8] sm:$0xff]
    %v221 = vld [vmem:[#allocation7 + $0x10] sm:$0xff]
    %v222 = vld [vmem:[#allocation7 + $0x18] sm:$0xff]
    %v223 = vld [vmem:[#allocation7 + $0x20] sm:$0xff]
    %v224 = vld [vmem:[#allocation7 + $0x28] sm:$0xff]
    %v225 = vld [vmem:[#allocation7 + $0x30] sm:$0xff]
    %v226 = vld [vmem:[#allocation7 + $0x38] sm:$0xff]
    %v227 = vld [vmem:[#allocation7 + $0x40] sm:$0xff]
    %v228 = vld [vmem:[#allocation7 + $0x48] sm:$0xff]
    %v229 = vld [vmem:[#allocation7 + $0x50] sm:$0xff]
    %v230 = vld [vmem:[#allocation7 + $0x58] sm:$0xff]
    %v231 = vld [vmem:[#allocation7 + $0x60] sm:$0xff]
    %v232 = vld [vmem:[#allocation7 + $0x68] sm:$0xff]
    %v233 = vld [vmem:[#allocation7 + $0x70] sm:$0xff]
    %v234 = vld [vmem:[#allocation7 + $0x78] sm:$0xff]
    %v235 = vld [vmem:[%s6] sm:$0x1]
    %v237 = vlaneseq
    %v238 = vshrl.u32 %v237, 7
    %v239 = vsub.s32 0, %v238
    %v240 = vrot.slane %v235, %v239
    %242 = vmatprep.subr.mxu0 0.0
    %243 = vmatpush1.msra.mxu0 %v234
    %244 = vmatprep.subr.mxu0 0.0
    %245 = vmatpush1.msra.mxu0 %v233
    %246 = vmatprep.subr.mxu0 0.0
    %247 = vmatpush1.msra.mxu0 %v232
    %248 = vmatprep.subr.mxu0 0.0
    %249 = vmatpush1.msra.mxu0 %v231
    %250 = vmatprep.subr.mxu0 0.0
    %251 = vmatpush1.msra.mxu0 %v230
    %252 = vmatprep.subr.mxu0 0.0
    %253 = vmatpush1.msra.mxu0 %v229
    %254 = vmatprep.subr.mxu0 0.0
    %255 = vmatpush1.msra.mxu0 %v228
    %256 = vmatprep.subr.mxu0 0.0
    %257 = vmatpush1.msra.mxu0 %v227
    %258 = vmatprep.subr.mxu0 0.0
    %259 = vmatpush1.msra.mxu0 %v226
    %260 = vmatprep.subr.mxu0 0.0
    %261 = vmatpush1.msra.mxu0 %v225
    %262 = vmatprep.subr.mxu0 0.0
    %263 = vmatpush1.msra.mxu0 %v224
    %264 = vmatprep.subr.mxu0 0.0
    %265 = vmatpush1.msra.mxu0 %v223
    %266 = vmatprep.subr.mxu0 0.0
    %267 = vmatpush1.msra.mxu0 %v222
    %268 = vmatprep.subr.mxu0 0.0
    %269 = vmatpush1.msra.mxu0 %v221
    %270 = vmatprep.subr.mxu0 0.0
    %271 = vmatpush1.msra.mxu0 %v220
    %272 = vmatprep.subr.mxu0 0.0
    %273 = vmatpush1.msra.mxu0 %v219
    %274 = vmatprep.subr.mxu0 0.0
    %275 = vmatpush2.msra.mxu0 0.0
    %276 = vmatprep.subr.mxu0 0.0
    %277 = vmatpush2.msra.mxu0 0.0
    %278 = vmatprep.subr.mxu0 0.0
    %279 = vmatpush2.msra.mxu0 0.0
    %280 = vmatprep.subr.mxu0 0.0
    %281 = vmatpush2.msra.mxu0 0.0
    %282 = vmatprep.subr.mxu0 0.0
    %283 = vmatpush2.msra.mxu0 0.0
    %284 = vmatprep.subr.mxu0 0.0
    %285 = vmatpush2.msra.mxu0 0.0
    %286 = vmatprep.subr.mxu0 0.0
    %287 = vmatpush2.msra.mxu0 0.0
    %288 = vmatprep.subr.mxu0 0.0
    %289 = vmatpush2.msra.mxu0 0.0
    %290 = vmatprep.subr.mxu0 0.0
    %291 = vmatpush2.msra.mxu0 0.0
    %292 = vmatprep.subr.mxu0 0.0
    %293 = vmatpush2.msra.mxu0 0.0
    %294 = vmatprep.subr.mxu0 0.0
    %295 = vmatpush2.msra.mxu0 0.0
    %296 = vmatprep.subr.mxu0 0.0
    %297 = vmatpush2.msra.mxu0 0.0
    %298 = vmatprep.subr.mxu0 0.0
    %299 = vmatpush2.msra.mxu0 0.0
    %300 = vmatprep.subr.mxu0 0.0
    %301 = vmatpush2.msra.mxu0 0.0
    %302 = vmatprep.subr.mxu0 0.0
    %303 = vmatpush2.msra.mxu0 0.0
    %304 = vmatprep.subr.mxu0 0.0
    %305 = vmatpush2.msra.mxu0 0.0
    %306 = vmatprep.mubr.f32.mxu0 0.0
    %307 = vmatmul.mubr.f32.gmra.mxu0 %v218
    %v308 = vpop.f32.mrf.mxu0
    %v309 = vadd.f32 %v240, %v308
    %v310 = vpop.f32.mrf.mxu0
    %311 = vdwg.mxu0
    %v312 = vld [vmem:[%s7] sm:$0x1]
    %v313 = vld [vmem:[%s8] sm:$0x1]
    %314 = vadd.xlane.f32.xlu0 %v309
    %v315 = vpop.xlane.xlu0 %314
    %v316 = vmul.f32 %v315, 0.03125
    %v317 = vmul.f32 %v309, %v309
    %318 = vadd.xlane.f32.xlu0 %v317
    %v319 = vpop.xlane.xlu0 %318
    %v320 = vmul.f32 %v319, 0.03125
    %v321 = vmul.f32 %v316, %v316
    %v322 = vsub.f32 %v320, %v321
    %v323 = vmax.f32 %v322, 0.0
    %v324 = vsub.f32 %v309, %v316
    %v325 = vadd.f32 %v323, 1e-05
    %v326 = vrsqrt.pop %v325
    %v327 = vmul.f32 %v324, %v326
    %v329 = vlaneseq
    %v330 = vshrl.u32 %v329, 7
    %v331 = vsub.s32 0, %v330
    %v332 = vrot.slane %v312, %v331
    %v334 = vmul.f32 %v327, %v332
    %v336 = vlaneseq
    %v337 = vshrl.u32 %v336, 7
    %v338 = vsub.s32 0, %v337
    %v339 = vrot.slane %v313, %v338
    %v341 = vadd.f32 %v334, %v339
    %vm342 = vcmp.gt.f32.partialorder %v341, 0.0
    %v343 = vmul.f32 %v341, 0.01
    %v344 = vsel %vm342, %v341, %v343
    %v345 = vld [vmem:[#allocation8] sm:$0xff]
    %v346 = vld [vmem:[#allocation8 + $0x8] sm:$0xff]
    %v347 = vld [vmem:[#allocation8 + $0x10] sm:$0xff]
    %v348 = vld [vmem:[#allocation8 + $0x18] sm:$0xff]
    %v349 = vld [vmem:[#allocation8 + $0x20] sm:$0xff]
    %v350 = vld [vmem:[#allocation8 + $0x28] sm:$0xff]
    %v351 = vld [vmem:[#allocation8 + $0x30] sm:$0xff]
    %v352 = vld [vmem:[#allocation8 + $0x38] sm:$0xff]
    %v353 = vld [vmem:[#allocation8 + $0x40] sm:$0xff]
    %v354 = vld [vmem:[#allocation8 + $0x48] sm:$0xff]
    %v355 = vld [vmem:[#allocation8 + $0x50] sm:$0xff]
    %v356 = vld [vmem:[#allocation8 + $0x58] sm:$0xff]
    %v357 = vld [vmem:[#allocation8 + $0x60] sm:$0xff]
    %v358 = vld [vmem:[#allocation8 + $0x68] sm:$0xff]
    %v359 = vld [vmem:[#allocation8 + $0x70] sm:$0xff]
    %v360 = vld [vmem:[#allocation8 + $0x78] sm:$0xff]
    %v361 = vld [vmem:[%s10] sm:$0x1]
    %v363 = vlaneseq
    %v364 = vshrl.u32 %v363, 7
    %v365 = vsub.s32 0, %v364
    %v366 = vrot.slane %v361, %v365
    %368 = vmatprep.subr.mxu0 0.0
    %369 = vmatpush1.msra.mxu0 %v360
    %370 = vmatprep.subr.mxu0 0.0
    %371 = vmatpush1.msra.mxu0 %v359
    %372 = vmatprep.subr.mxu0 0.0
    %373 = vmatpush1.msra.mxu0 %v358
    %374 = vmatprep.subr.mxu0 0.0
    %375 = vmatpush1.msra.mxu0 %v357
    %376 = vmatprep.subr.mxu0 0.0
    %377 = vmatpush1.msra.mxu0 %v356
    %378 = vmatprep.subr.mxu0 0.0
    %379 = vmatpush1.msra.mxu0 %v355
    %380 = vmatprep.subr.mxu0 0.0
    %381 = vmatpush1.msra.mxu0 %v354
    %382 = vmatprep.subr.mxu0 0.0
    %383 = vmatpush1.msra.mxu0 %v353
    %384 = vmatprep.subr.mxu0 0.0
    %385 = vmatpush1.msra.mxu0 %v352
    %386 = vmatprep.subr.mxu0 0.0
    %387 = vmatpush1.msra.mxu0 %v351
    %388 = vmatprep.subr.mxu0 0.0
    %389 = vmatpush1.msra.mxu0 %v350
    %390 = vmatprep.subr.mxu0 0.0
    %391 = vmatpush1.msra.mxu0 %v349
    %392 = vmatprep.subr.mxu0 0.0
    %393 = vmatpush1.msra.mxu0 %v348
    %394 = vmatprep.subr.mxu0 0.0
    %395 = vmatpush1.msra.mxu0 %v347
    %396 = vmatprep.subr.mxu0 0.0
    %397 = vmatpush1.msra.mxu0 %v346
    %398 = vmatprep.subr.mxu0 0.0
    %399 = vmatpush1.msra.mxu0 %v345
    %400 = vmatprep.subr.mxu0 0.0
    %401 = vmatpush2.msra.mxu0 0.0
    %402 = vmatprep.subr.mxu0 0.0
    %403 = vmatpush2.msra.mxu0 0.0
    %404 = vmatprep.subr.mxu0 0.0
    %405 = vmatpush2.msra.mxu0 0.0
    %406 = vmatprep.subr.mxu0 0.0
    %407 = vmatpush2.msra.mxu0 0.0
    %408 = vmatprep.subr.mxu0 0.0
    %409 = vmatpush2.msra.mxu0 0.0
    %410 = vmatprep.subr.mxu0 0.0
    %411 = vmatpush2.msra.mxu0 0.0
    %412 = vmatprep.subr.mxu0 0.0
    %413 = vmatpush2.msra.mxu0 0.0
    %414 = vmatprep.subr.mxu0 0.0
    %415 = vmatpush2.msra.mxu0 0.0
    %416 = vmatprep.subr.mxu0 0.0
    %417 = vmatpush2.msra.mxu0 0.0
    %418 = vmatprep.subr.mxu0 0.0
    %419 = vmatpush2.msra.mxu0 0.0
    %420 = vmatprep.subr.mxu0 0.0
    %421 = vmatpush2.msra.mxu0 0.0
    %422 = vmatprep.subr.mxu0 0.0
    %423 = vmatpush2.msra.mxu0 0.0
    %424 = vmatprep.subr.mxu0 0.0
    %425 = vmatpush2.msra.mxu0 0.0
    %426 = vmatprep.subr.mxu0 0.0
    %427 = vmatpush2.msra.mxu0 0.0
    %428 = vmatprep.subr.mxu0 0.0
    %429 = vmatpush2.msra.mxu0 0.0
    %430 = vmatprep.subr.mxu0 0.0
    %431 = vmatpush2.msra.mxu0 0.0
    %432 = vmatprep.mubr.f32.mxu0 0.0
    %433 = vmatmul.mubr.f32.gmra.mxu0 %v344
    %v434 = vpop.f32.mrf.mxu0
    %v435 = vadd.f32 %v366, %v434
    %v436 = vpop.f32.mrf.mxu0
    %437 = vdwg.mxu0
    %v438 = vtanh.pop %v435
    %439 = vst [vmem:[#allocation10] sm:$0xff] %v438
    // Predicated region
    $region62: #{tpu_custom_call.1} parent=1 // pred_check
      _
    $region63: #{tpu_custom_call.1} parent=1 // pred_check_branch
      %441 = sbr.rel (0) target = $region65
    $region64: #{tpu_custom_call.1} parent=1 // pred_region
      %s443 = ssub.s32 128, 128
      %444 = vsyncadd [#allocation4], %s443
      %s446 = sshll.u32 [#allocation10], 4
      %s447 = int_to_ptr.vmem [resolvable:$true] %s446
      %449 = dma.vmem_to_hbm [thread:$0]  %s447, 128, %s11, [#allocation4]
    $region65: #{tpu_custom_call.1} parent=1 // pred_fallthru
      _
    // Predicated region
    $region66: #{tpu_custom_call.1} parent=1 // pred_check
      _
    $region67: #{tpu_custom_call.1} parent=1 // pred_check_branch
      %451 = sbr.rel (0) target = $region69
    $region68: #{tpu_custom_call.1} parent=1 // pred_region
      %452 = dma.done [#allocation4], 128
    $region69: #{tpu_custom_call.1} parent=1 // pred_fallthru
      _
    %453 = vsyncpa [#allocation3], 1
    %454 = vsyncpa [#allocation6], 1
    %455 = vsyncpa [#allocation9], 1
    %456 = vsyncpa [#allocation4], 1

</llo_original>
